<compile_context>
chip_gen: v5e
topology: v5e:2x2
jax: 0.10.0
libtpu: 0.0.40
codegen_flags: <defaults>
</compile_context>

<pallas_src>
import math

import jax
import jax.numpy as jnp
from jax import lax
from jax.experimental import pallas as pl
from jax.experimental.pallas import tpu as pltpu

# ----------------------------- model dims (small) -----------------------------
BATCH = 2
IN_CH = 3
IMG = 16
PATCH = 8
GRID_HW = IMG // PATCH              # 2
N_PATCHES = GRID_HW * GRID_HW       # 4
SEQ = N_PATCHES + 1                 # 5 (CLS + patches)
WIDTH = 32
HEADS = 4
HEAD_DIM = WIDTH // HEADS           # 8
MLP = 4 * WIDTH                     # 128
LAYERS = 2
LN_EPS = 1e-5
PATCH_DIM = IN_CH * PATCH * PATCH   # 192 (lane dim of the patch GEMM input)
SCALE = 1.0 / math.sqrt(HEAD_DIM)


# --------------------------------- kernel -------------------------------------
def _layernorm(x, g, b):
    x = x.astype(jnp.float32)
    mu = jnp.mean(x, axis=-1, keepdims=True)
    xc = x - mu
    var = jnp.mean(xc * xc, axis=-1, keepdims=True)
    return xc * lax.rsqrt(var + LN_EPS) * g + b


def _encoder_kernel(
    # stem / head params (resident, constant block index)
    patches_ref, convw_ref, cls_ref, pos_ref, preg_ref, preb_ref,
    postg_ref, postb_ref,
    # per-layer stacked params (block index = layer -> pipelined prefetch)
    ln1g_ref, ln1b_ref, ln2g_ref, ln2b_ref,
    wqkv_ref, bqkv_ref, wout_ref, bout_ref,
    wfc_ref, bfc_ref, wproj_ref, bproj_ref,
    # output + scratch
    out_ref, x_scr,
):
    layer = pl.program_id(1)
    last_layer = pl.num_programs(1) - 1

    # ---------- stem at layer 0: conv1-as-GEMM + CLS + pos-embed + ln_pre ----------
    @pl.when(layer == 0)
    def _stem():
        tok = jnp.dot(patches_ref[0], convw_ref[...],
                      preferred_element_type=jnp.float32)          # (N_PATCHES, W)
        pos = pos_ref[...]                                          # (SEQ, W)
        cls_row = cls_ref[...] + pos[0:1, :]                        # (1, W)
        tok = tok + pos[1:, :]                                      # (N_PATCHES, W)
        g, b = preg_ref[...], preb_ref[...]
        x_scr[0:1, :] = _layernorm(cls_row, g, b)
        x_scr[1:, :] = _layernorm(tok, g, b)

    # ---------- one ResidualAttentionBlock per grid step along the layer axis ------
    x = x_scr[...]                                                  # (SEQ, W) f32

    # attention branch: x + out_proj(attn(ln_1(x)))
    h = _layernorm(x, ln1g_ref[0], ln1b_ref[0]).astype(jnp.bfloat16)
    qkv = jnp.dot(h, wqkv_ref[0],
                  preferred_element_type=jnp.float32) + bqkv_ref[0]  # (SEQ, 3W) f32

    w_out_heads = wout_ref[0]                                       # (HEADS, Dh, W) bf16
    o_acc = jnp.zeros((SEQ, WIDTH), jnp.float32)
    for hd in range(HEADS):      # static unroll; head merge folded into out-proj sum
        lo = hd * HEAD_DIM
        q = qkv[:, lo:lo + HEAD_DIM].astype(jnp.bfloat16)            # (SEQ, Dh)
        k = qkv[:, WIDTH + lo:WIDTH + lo + HEAD_DIM].astype(jnp.bfloat16)
        v = qkv[:, 2 * WIDTH + lo:2 * WIDTH + lo + HEAD_DIM].astype(jnp.bfloat16)
        s = lax.dot_general(q, k, (((1,), (1,)), ((), ())),
                            preferred_element_type=jnp.float32) * SCALE  # (SEQ, SEQ)
        s = s - jnp.max(s, axis=-1, keepdims=True)
        p = jnp.exp(s)
        p = p * pl.reciprocal(jnp.sum(p, axis=-1, keepdims=True), approx=True)
        oh = jnp.dot(p.astype(jnp.bfloat16), v,
                     preferred_element_type=jnp.float32)             # (SEQ, Dh)
        o_acc = o_acc + jnp.dot(oh.astype(jnp.bfloat16), w_out_heads[hd],
                                preferred_element_type=jnp.float32)  # (SEQ, W)
    x = x + o_acc + bout_ref[0]

    # mlp branch: x + c_proj(QuickGELU(c_fc(ln_2(x))))
    h2 = _layernorm(x, ln2g_ref[0], ln2b_ref[0]).astype(jnp.bfloat16)
    hm = jnp.dot(h2, wfc_ref[0],
                 preferred_element_type=jnp.float32) + bfc_ref[0]    # (SEQ, MLP)
    hm = hm * jax.nn.sigmoid(1.702 * hm)                             # QuickGELU
    mo = jnp.dot(hm.astype(jnp.bfloat16), wproj_ref[0],
                 preferred_element_type=jnp.float32) + bproj_ref[0]  # (SEQ, W)
    x = x + mo
    x_scr[...] = x

    # ---------- ln_post on patch tokens (drop CLS) at the last layer ----------
    @pl.when(layer == last_layer)
    def _finish():
        y = _layernorm(x[1:, :], postg_ref[...], postb_ref[...])     # (N_PATCHES, W)
        out_ref[0] = y.astype(out_ref.dtype)


# --------------------------------- params --------------------------------------
def init_params(key):
    ks = iter(jax.random.split(key, 64))
    nrm = lambda shape, s=0.02: (s * jax.random.normal(next(ks), shape)).astype(jnp.float32)
    params = {
        # conv1: Conv2d(3, WIDTH, kernel=PATCH, stride=PATCH, bias=False)
        # stored as GEMM weight (C*P*P, WIDTH), row order (c, kh, kw)
        "conv1_w": nrm((PATCH_DIM, WIDTH)),
        "class_embedding": nrm((WIDTH,)),
        "positional_embedding": nrm((SEQ, WIDTH)),
        "ln_pre_g": jnp.ones((WIDTH,), jnp.float32),
        "ln_pre_b": jnp.zeros((WIDTH,), jnp.float32),
        "ln_post_g": jnp.ones((WIDTH,), jnp.float32),
        "ln_post_b": jnp.zeros((WIDTH,), jnp.float32),
        "blocks": [],
    }
    for _ in range(LAYERS):
        params["blocks"].append({
            "ln1_g": jnp.ones((WIDTH,), jnp.float32),
            "ln1_b": jnp.zeros((WIDTH,), jnp.float32),
            "ln2_g": jnp.ones((WIDTH,), jnp.float32),
            "ln2_b": jnp.zeros((WIDTH,), jnp.float32),
            "w_qkv": nrm((WIDTH, 3 * WIDTH)),   # attn in_proj
            "b_qkv": jnp.zeros((3 * WIDTH,), jnp.float32),
            "w_out": nrm((WIDTH, WIDTH)),       # attn out_proj
            "b_out": jnp.zeros((WIDTH,), jnp.float32),
            "w_fc": nrm((WIDTH, MLP)),          # mlp.c_fc
            "b_fc": jnp.zeros((MLP,), jnp.float32),
            "w_proj": nrm((MLP, WIDTH)),        # mlp.c_proj
            "b_proj": jnp.zeros((WIDTH,), jnp.float32),
        })
    return params


# -------------------------------- forward --------------------------------------
def _patchify(x_nchw):
    """(B, C, H, W) -> (B, N_PATCHES, C*P*P); lane dim = 192, rows ordered (c,kh,kw)."""
    b = x_nchw.shape[0]
    x = x_nchw.reshape(b, IN_CH, GRID_HW, PATCH, GRID_HW, PATCH)
    x = x.transpose(0, 2, 4, 1, 3, 5)
    return x.reshape(b, N_PATCHES, PATCH_DIM)


@jax.jit
def image_encoder_forward(x_nchw, params):
    """ImageEncoder.forward(x) -> grid_feats (B, N_PATCHES, WIDTH), float32."""
    b = x_nchw.shape[0]
    # TODO(synk): CLIP's `blk.freezing` / predict/no_grad flags only toggle grad
    # hooks; they have no inference-side effect, so they are not modeled here.
    x_nchw = x_nchw.astype(jnp.float32)
    patches = _patchify(x_nchw).astype(jnp.bfloat16)        # activations in bf16 (as CLIP fp16)

    bf = lambda a: a.astype(jnp.bfloat16)
    blocks = params["blocks"]
    stack = lambda name: jnp.stack([blk[name] for blk in blocks], axis=0)

    conv_w = bf(params["conv1_w"])                           # (192, W)
    cls = params["class_embedding"].reshape(1, WIDTH)
    pos = params["positional_embedding"]                     # (SEQ, W)
    pre_g = params["ln_pre_g"].reshape(1, WIDTH)
    pre_b = params["ln_pre_b"].reshape(1, WIDTH)
    post_g = params["ln_post_g"].reshape(1, WIDTH)
    post_b = params["ln_post_b"].reshape(1, WIDTH)

    ln1_g = stack("ln1_g").reshape(LAYERS, 1, WIDTH)
    ln1_b = stack("ln1_b").reshape(LAYERS, 1, WIDTH)
    ln2_g = stack("ln2_g").reshape(LAYERS, 1, WIDTH)
    ln2_b = stack("ln2_b").reshape(LAYERS, 1, WIDTH)
    w_qkv = bf(stack("w_qkv"))                               # (L, W, 3W)
    b_qkv = stack("b_qkv").reshape(LAYERS, 1, 3 * WIDTH)
    w_out = bf(stack("w_out")).reshape(LAYERS, HEADS, HEAD_DIM, WIDTH)
    b_out = stack("b_out").reshape(LAYERS, 1, WIDTH)
    w_fc = bf(stack("w_fc"))                                 # (L, W, MLP)
    b_fc = stack("b_fc").reshape(LAYERS, 1, MLP)
    w_proj = bf(stack("w_proj"))                             # (L, MLP, W)
    b_proj = stack("b_proj").reshape(LAYERS, 1, WIDTH)

    def const_spec(arr):   # resident across the whole grid (fetched once)
        return pl.BlockSpec(arr.shape, lambda bi, li, _r=arr.ndim: (0,) * _r)

    def batch_spec(arr):   # one block per batch element
        return pl.BlockSpec((1,) + arr.shape[1:],
                            lambda bi, li, _r=arr.ndim: (bi,) + (0,) * (_r - 1))

    def layer_spec(arr):   # one block per layer -> prefetch layer l+1 during layer l
        return pl.BlockSpec((1,) + arr.shape[1:],
                            lambda bi, li, _r=arr.ndim: (li,) + (0,) * (_r - 1))

    inputs = [patches, conv_w, cls, pos, pre_g, pre_b, post_g, post_b,
              ln1_g, ln1_b, ln2_g, ln2_b, w_qkv, b_qkv, w_out, b_out,
              w_fc, b_fc, w_proj, b_proj]
    in_specs = [batch_spec(patches), const_spec(conv_w), const_spec(cls),
                const_spec(pos), const_spec(pre_g), const_spec(pre_b),
                const_spec(post_g), const_spec(post_b),
                layer_spec(ln1_g), layer_spec(ln1_b), layer_spec(ln2_g),
                layer_spec(ln2_b), layer_spec(w_qkv), layer_spec(b_qkv),
                layer_spec(w_out), layer_spec(b_out), layer_spec(w_fc),
                layer_spec(b_fc), layer_spec(w_proj), layer_spec(b_proj)]

    out = pl.pallas_call(
        _encoder_kernel,
        out_shape=jax.ShapeDtypeStruct((b, N_PATCHES, WIDTH), jnp.float32),
        grid_spec=pltpu.PrefetchScalarGridSpec(
            num_scalar_prefetch=0,
            grid=(b, LAYERS),                       # batch parallel, layers sequential
            in_specs=in_specs,
            out_specs=pl.BlockSpec((1, N_PATCHES, WIDTH), lambda bi, li: (bi, 0, 0)),
            scratch_shapes=[pltpu.VMEM((SEQ, WIDTH), jnp.float32)],   # resident activation
        ),
        compiler_params=pltpu.CompilerParams(
            dimension_semantics=("parallel", "arbitrary")),
    )(*inputs)
    return out


# ----------------------- pure-JAX reference (same numerics) ---------------------
@jax.jit
def reference_forward(x_nchw, params):
    b = x_nchw.shape[0]
    x_nchw = x_nchw.astype(jnp.float32)
    xp = _patchify(x_nchw)

    def ln(x, g, b_):
        mu = jnp.mean(x, -1, keepdims=True)
        var = jnp.mean((x - mu) ** 2, -1, keepdims=True)
        return (x - mu) * lax.rsqrt(var + LN_EPS) * g + b_

    def mm(a, w):   # bf16 operands, f32 accumulation (matches the kernel)
        return jnp.dot(a.astype(jnp.bfloat16), w.astype(jnp.bfloat16),
                       preferred_element_type=jnp.float32)

    tok = mm(xp.reshape(b * N_PATCHES, PATCH_DIM),
             params["conv1_w"]).reshape(b, N_PATCHES, WIDTH)
    cls = jnp.broadcast_to(params["class_embedding"], (b, 1, WIDTH))
    x = jnp.concatenate([cls, tok], axis=1) + params["positional_embedding"][None]
    x = ln(x, params["ln_pre_g"], params["ln_pre_b"])
    for p in params["blocks"]:
        h = ln(x, p["ln1_g"], p["ln1_b"])
        qkv = mm(h.reshape(b * SEQ, WIDTH), p["w_qkv"]) + p["b_qkv"]
        qkv = qkv.reshape(b, SEQ, 3, HEADS, HEAD_DIM)
        q = qkv[:, :, 0].transpose(0, 2, 1, 3).astype(jnp.bfloat16)
        k = qkv[:, :, 1].transpose(0, 2, 1, 3).astype(jnp.bfloat16)
        v = qkv[:, :, 2].transpose(0, 2, 1, 3).astype(jnp.bfloat16)
        s = jnp.einsum("bhqd,bhkd->bhqk", q, k,
                       preferred_element_type=jnp.float32) * SCALE
        pa = jax.nn.softmax(s, axis=-1)
        o = jnp.einsum("bhqk,bhkd->bhqd", pa.astype(jnp.bfloat16), v,
                       preferred_element_type=jnp.float32)
        o = o.transpose(0, 2, 1, 3).reshape(b * SEQ, WIDTH)
        o = mm(o, p["w_out"]) + p["b_out"]
        x = x + o.reshape(b, SEQ, WIDTH)
        h2 = ln(x, p["ln2_g"], p["ln2_b"])
        hm = mm(h2.reshape(b * SEQ, WIDTH), p["w_fc"]) + p["b_fc"]
        hm = hm * jax.nn.sigmoid(1.702 * hm)
        mo = mm(hm, p["w_proj"]) + p["b_proj"]
        x = x + mo.reshape(b, SEQ, WIDTH)
    grid_feats = ln(x[:, 1:, :], params["ln_post_g"], params["ln_post_b"])
    return grid_feats.astype(jnp.float32)


# ----------------------------------- main ---------------------------------------
if __name__ == "__main__":
    key = jax.random.PRNGKey(0)
    k_params, k_x = jax.random.split(key)
    params = init_params(k_params)
    x = jax.random.normal(k_x, (BATCH, IN_CH, IMG, IMG), dtype=jnp.float32)

    out = image_encoder_forward(x, params)
    jax.block_until_ready(out)
    assert out.shape == (BATCH, N_PATCHES, WIDTH)
    assert out.dtype == jnp.float32

    # tolerance-based reference check (approx reciprocal + op-order diffs only)
    ref = reference_forward(x, params)
    jax.block_until_ready(ref)
    max_err = float(jnp.max(jnp.abs(out - ref)))
    assert max_err < 2e-2, f"max abs error vs reference too large: {max_err}"

    print("KERNEL_OK")
</pallas_src>

<mosaic_0001>
module attributes {stable_mosaic.version = 11 : i64} {
  func.func @_encoder_kernel(%arg0: i32, %arg1: i32, %arg2: memref<1x4x192xbf16, #tpu.memory_space<vmem>>, %arg3: memref<192x32xbf16, #tpu.memory_space<vmem>>, %arg4: memref<1x32xf32, #tpu.memory_space<vmem>>, %arg5: memref<5x32xf32, #tpu.memory_space<vmem>>, %arg6: memref<1x32xf32, #tpu.memory_space<vmem>>, %arg7: memref<1x32xf32, #tpu.memory_space<vmem>>, %arg8: memref<1x32xf32, #tpu.memory_space<vmem>>, %arg9: memref<1x32xf32, #tpu.memory_space<vmem>>, %arg10: memref<1x1x32xf32, #tpu.memory_space<vmem>>, %arg11: memref<1x1x32xf32, #tpu.memory_space<vmem>>, %arg12: memref<1x1x32xf32, #tpu.memory_space<vmem>>, %arg13: memref<1x1x32xf32, #tpu.memory_space<vmem>>, %arg14: memref<1x32x96xbf16, #tpu.memory_space<vmem>>, %arg15: memref<1x1x96xf32, #tpu.memory_space<vmem>>, %arg16: memref<1x4x8x32xbf16, #tpu.memory_space<vmem>>, %arg17: memref<1x1x32xf32, #tpu.memory_space<vmem>>, %arg18: memref<1x32x128xbf16, #tpu.memory_space<vmem>>, %arg19: memref<1x1x128xf32, #tpu.memory_space<vmem>>, %arg20: memref<1x128x32xbf16, #tpu.memory_space<vmem>>, %arg21: memref<1x1x32xf32, #tpu.memory_space<vmem>>, %arg22: memref<1x4x32xf32, #tpu.memory_space<vmem>>, %arg23: memref<5x32xf32, #tpu.memory_space<vmem>>) attributes {dimension_semantics = [#tpu.dimension_semantics<parallel>, #tpu.dimension_semantics<arbitrary>], iteration_bounds = array<i64: 2, 2>, scalar_prefetch = 0 : i64, scratch_operands = 1 : i64, tpu.core_type = #tpu.core_type<tc>, window_params = [{transform_indices = @transform_0, window_bounds = array<i64: 1, 4, 192>}, {pipeline_mode = #tpu.pipeline_mode<synchronous>, transform_indices = @transform_1, window_bounds = array<i64: 192, 32>}, {pipeline_mode = #tpu.pipeline_mode<synchronous>, transform_indices = @transform_2, window_bounds = array<i64: 1, 32>}, {pipeline_mode = #tpu.pipeline_mode<synchronous>, transform_indices = @transform_3, window_bounds = array<i64: 5, 32>}, {pipeline_mode = #tpu.pipeline_mode<synchronous>, transform_indices = @transform_4, window_bounds = array<i64: 1, 32>}, {pipeline_mode = #tpu.pipeline_mode<synchronous>, transform_indices = @transform_5, window_bounds = array<i64: 1, 32>}, {pipeline_mode = #tpu.pipeline_mode<synchronous>, transform_indices = @transform_6, window_bounds = array<i64: 1, 32>}, {pipeline_mode = #tpu.pipeline_mode<synchronous>, transform_indices = @transform_7, window_bounds = array<i64: 1, 32>}, {transform_indices = @transform_8, window_bounds = array<i64: 1, 1, 32>}, {transform_indices = @transform_9, window_bounds = array<i64: 1, 1, 32>}, {transform_indices = @transform_10, window_bounds = array<i64: 1, 1, 32>}, {transform_indices = @transform_11, window_bounds = array<i64: 1, 1, 32>}, {transform_indices = @transform_12, window_bounds = array<i64: 1, 32, 96>}, {transform_indices = @transform_13, window_bounds = array<i64: 1, 1, 96>}, {transform_indices = @transform_14, window_bounds = array<i64: 1, 4, 8, 32>}, {transform_indices = @transform_15, window_bounds = array<i64: 1, 1, 32>}, {transform_indices = @transform_16, window_bounds = array<i64: 1, 32, 128>}, {transform_indices = @transform_17, window_bounds = array<i64: 1, 1, 128>}, {transform_indices = @transform_18, window_bounds = array<i64: 1, 128, 32>}, {transform_indices = @transform_19, window_bounds = array<i64: 1, 1, 32>}, {transform_indices = @transform_20, window_bounds = array<i64: 1, 4, 32>}]} {
    %c0_i32 = arith.constant 0 : i32
    %0 = arith.cmpi eq, %arg1, %c0_i32 : i32
    %1 = arith.extui %0 : i1 to i32
    %c0_i32_0 = arith.constant 0 : i32
    %2 = arith.cmpi ne, %1, %c0_i32_0 : i32
    scf.if %2 {
      %c0_81 = arith.constant 0 : index
      %c0_82 = arith.constant 0 : index
      %c0_83 = arith.constant 0 : index
      %201 = vector.load %arg2[%c0_81, %c0_82, %c0_83] : memref<1x4x192xbf16, #tpu.memory_space<vmem>>, vector<1x4x192xbf16>
      %202 = vector.shape_cast %201 : vector<1x4x192xbf16> to vector<4x192xbf16>
      %c0_84 = arith.constant 0 : index
      %c0_85 = arith.constant 0 : index
      %203 = vector.load %arg3[%c0_84, %c0_85] : memref<192x32xbf16, #tpu.memory_space<vmem>>, vector<192x32xbf16>
      %cst_86 = arith.constant dense<0.000000e+00> : vector<4x32xf32>
      %204 = tpu.matmul %202, %203, %cst_86 {dimension_numbers = #tpu.dot_dimension_numbers<[1], [0], [0], [1], [0, 0, 1, 1], [], []>} : vector<4x192xbf16>, vector<192x32xbf16>, vector<4x32xf32> -> vector<4x32xf32>
      %c0_87 = arith.constant 0 : index
      %c0_88 = arith.constant 0 : index
      %205 = vector.load %arg5[%c0_87, %c0_88] : memref<5x32xf32, #tpu.memory_space<vmem>>, vector<5x32xf32>
      %c0_89 = arith.constant 0 : index
      %c0_90 = arith.constant 0 : index
      %206 = vector.load %arg4[%c0_89, %c0_90] : memref<1x32xf32, #tpu.memory_space<vmem>>, vector<1x32xf32>
      %207 = vector.extract_strided_slice %205 {offsets = [0, 0], sizes = [1, 32], strides = [1, 1]} : vector<5x32xf32> to vector<1x32xf32>
      %208 = arith.addf %206, %207 : vector<1x32xf32>
      %209 = vector.extract_strided_slice %205 {offsets = [1, 0], sizes = [4, 32], strides = [1, 1]} : vector<5x32xf32> to vector<4x32xf32>
      %210 = arith.addf %204, %209 : vector<4x32xf32>
      %c0_91 = arith.constant 0 : index
      %c0_92 = arith.constant 0 : index
      %211 = vector.load %arg6[%c0_91, %c0_92] : memref<1x32xf32, #tpu.memory_space<vmem>>, vector<1x32xf32>
      %c0_93 = arith.constant 0 : index
      %c0_94 = arith.constant 0 : index
      %212 = vector.load %arg7[%c0_93, %c0_94] : memref<1x32xf32, #tpu.memory_space<vmem>>, vector<1x32xf32>
      %cst_95 = arith.constant dense<0.000000e+00> : vector<1xf32>
      %213 = vector.multi_reduction <add>, %208, %cst_95 [1] : vector<1x32xf32> to vector<1xf32>
      %214 = vector.shape_cast %213 : vector<1xf32> to vector<1x1xf32>
      %cst_96 = arith.constant 3.200000e+01 : f32
      %215 = vector.broadcast %cst_96 : f32 to vector<1x1xf32>
      %216 = arith.divf %214, %215 : vector<1x1xf32>
      %217 = vector.broadcast %216 : vector<1x1xf32> to vector<1x32xf32>
      %218 = arith.subf %208, %217 : vector<1x32xf32>
      %219 = arith.mulf %218, %218 : vector<1x32xf32>
      %cst_97 = arith.constant dense<0.000000e+00> : vector<1xf32>
      %220 = vector.multi_reduction <add>, %219, %cst_97 [1] : vector<1x32xf32> to vector<1xf32>
      %221 = vector.shape_cast %220 : vector<1xf32> to vector<1x1xf32>
      %cst_98 = arith.constant 3.200000e+01 : f32
      %222 = vector.broadcast %cst_98 : f32 to vector<1x1xf32>
      %223 = arith.divf %221, %222 : vector<1x1xf32>
      %cst_99 = arith.constant 9.99999974E-6 : f32
      %224 = vector.broadcast %cst_99 : f32 to vector<1x1xf32>
      %225 = arith.addf %223, %224 : vector<1x1xf32>
      %226 = math.rsqrt %225 : vector<1x1xf32>
      %227 = vector.broadcast %226 : vector<1x1xf32> to vector<1x32xf32>
      %228 = arith.mulf %218, %227 : vector<1x32xf32>
      %229 = arith.mulf %228, %211 : vector<1x32xf32>
      %230 = arith.addf %229, %212 : vector<1x32xf32>
      %c0_100 = arith.constant 0 : index
      %c0_101 = arith.constant 0 : index
      %231 = vector.load %arg23[%c0_100, %c0_101] : memref<5x32xf32, #tpu.memory_space<vmem>>, vector<1x32xf32>
      tpu.vector_store %arg23[%c0_100, %c0_101], %230 {strides = array<i32>} : memref<5x32xf32, #tpu.memory_space<vmem>>, vector<1x32xf32>,
      %cst_102 = arith.constant dense<0.000000e+00> : vector<4xf32>
      %232 = vector.multi_reduction <add>, %210, %cst_102 [1] : vector<4x32xf32> to vector<4xf32>
      %233 = vector.shape_cast %232 : vector<4xf32> to vector<4x1xf32>
      %cst_103 = arith.constant 3.200000e+01 : f32
      %234 = vector.broadcast %cst_103 : f32 to vector<4x1xf32>
      %235 = arith.divf %233, %234 : vector<4x1xf32>
      %236 = vector.broadcast %235 : vector<4x1xf32> to vector<4x32xf32>
      %237 = arith.subf %210, %236 : vector<4x32xf32>
      %238 = arith.mulf %237, %237 : vector<4x32xf32>
      %cst_104 = arith.constant dense<0.000000e+00> : vector<4xf32>
      %239 = vector.multi_reduction <add>, %238, %cst_104 [1] : vector<4x32xf32> to vector<4xf32>
      %240 = vector.shape_cast %239 : vector<4xf32> to vector<4x1xf32>
      %cst_105 = arith.constant 3.200000e+01 : f32
      %241 = vector.broadcast %cst_105 : f32 to vector<4x1xf32>
      %242 = arith.divf %240, %241 : vector<4x1xf32>
      %cst_106 = arith.constant 9.99999974E-6 : f32
      %243 = vector.broadcast %cst_106 : f32 to vector<4x1xf32>
      %244 = arith.addf %242, %243 : vector<4x1xf32>
      %245 = math.rsqrt %244 : vector<4x1xf32>
      %246 = vector.broadcast %245 : vector<4x1xf32> to vector<4x32xf32>
      %247 = arith.mulf %237, %246 : vector<4x32xf32>
      %248 = vector.broadcast %211 : vector<1x32xf32> to vector<4x32xf32>
      %249 = arith.mulf %247, %248 : vector<4x32xf32>
      %250 = vector.broadcast %212 : vector<1x32xf32> to vector<4x32xf32>
      %251 = arith.addf %249, %250 : vector<4x32xf32>
      %c1 = arith.constant 1 : index
      %c0_107 = arith.constant 0 : index
      %252 = vector.load %arg23[%c1, %c0_107] : memref<5x32xf32, #tpu.memory_space<vmem>>, vector<4x32xf32>
      tpu.vector_store %arg23[%c1, %c0_107], %251 {strides = array<i32>} : memref<5x32xf32, #tpu.memory_space<vmem>>, vector<4x32xf32>,
    } else {
    }
    %c0 = arith.constant 0 : index
    %c0_1 = arith.constant 0 : index
    %3 = vector.load %arg23[%c0, %c0_1] : memref<5x32xf32, #tpu.memory_space<vmem>>, vector<5x32xf32>
    %c0_2 = arith.constant 0 : index
    %c0_3 = arith.constant 0 : index
    %c0_4 = arith.constant 0 : index
    %4 = vector.load %arg10[%c0_2, %c0_3, %c0_4] : memref<1x1x32xf32, #tpu.memory_space<vmem>>, vector<1x1x32xf32>
    %5 = vector.shape_cast %4 : vector<1x1x32xf32> to vector<1x32xf32>
    %c0_5 = arith.constant 0 : index
    %c0_6 = arith.constant 0 : index
    %c0_7 = arith.constant 0 : index
    %6 = vector.load %arg11[%c0_5, %c0_6, %c0_7] : memref<1x1x32xf32, #tpu.memory_space<vmem>>, vector<1x1x32xf32>
    %7 = vector.shape_cast %6 : vector<1x1x32xf32> to vector<1x32xf32>
    %cst = arith.constant dense<0.000000e+00> : vector<5xf32>
    %8 = vector.multi_reduction <add>, %3, %cst [1] : vector<5x32xf32> to vector<5xf32>
    %9 = vector.shape_cast %8 : vector<5xf32> to vector<5x1xf32>
    %cst_8 = arith.constant 3.200000e+01 : f32
    %10 = vector.broadcast %cst_8 : f32 to vector<5x1xf32>
    %11 = arith.divf %9, %10 : vector<5x1xf32>
    %12 = vector.broadcast %11 : vector<5x1xf32> to vector<5x32xf32>
    %13 = arith.subf %3, %12 : vector<5x32xf32>
    %14 = arith.mulf %13, %13 : vector<5x32xf32>
    %cst_9 = arith.constant dense<0.000000e+00> : vector<5xf32>
    %15 = vector.multi_reduction <add>, %14, %cst_9 [1] : vector<5x32xf32> to vector<5xf32>
    %16 = vector.shape_cast %15 : vector<5xf32> to vector<5x1xf32>
    %cst_10 = arith.constant 3.200000e+01 : f32
    %17 = vector.broadcast %cst_10 : f32 to vector<5x1xf32>
    %18 = arith.divf %16, %17 : vector<5x1xf32>
    %cst_11 = arith.constant 9.99999974E-6 : f32
    %19 = vector.broadcast %cst_11 : f32 to vector<5x1xf32>
    %20 = arith.addf %18, %19 : vector<5x1xf32>
    %21 = math.rsqrt %20 : vector<5x1xf32>
    %22 = vector.broadcast %21 : vector<5x1xf32> to vector<5x32xf32>
    %23 = arith.mulf %13, %22 : vector<5x32xf32>
    %24 = vector.broadcast %5 : vector<1x32xf32> to vector<5x32xf32>
    %25 = arith.mulf %23, %24 : vector<5x32xf32>
    %26 = vector.broadcast %7 : vector<1x32xf32> to vector<5x32xf32>
    %27 = arith.addf %25, %26 : vector<5x32xf32>
    %28 = arith.truncf %27 : vector<5x32xf32> to vector<5x32xbf16>
    %c0_12 = arith.constant 0 : index
    %c0_13 = arith.constant 0 : index
    %c0_14 = arith.constant 0 : index
    %29 = vector.load %arg14[%c0_12, %c0_13, %c0_14] : memref<1x32x96xbf16, #tpu.memory_space<vmem>>, vector<1x32x96xbf16>
    %30 = vector.shape_cast %29 : vector<1x32x96xbf16> to vector<32x96xbf16>
    %cst_15 = arith.constant dense<0.000000e+00> : vector<5x96xf32>
    %31 = tpu.matmul %28, %30, %cst_15 {dimension_numbers = #tpu.dot_dimension_numbers<[1], [0], [0], [1], [0, 0, 1, 1], [], []>} : vector<5x32xbf16>, vector<32x96xbf16>, vector<5x96xf32> -> vector<5x96xf32>
    %c0_16 = arith.constant 0 : index
    %c0_17 = arith.constant 0 : index
    %c0_18 = arith.constant 0 : index
    %32 = vector.load %arg15[%c0_16, %c0_17, %c0_18] : memref<1x1x96xf32, #tpu.memory_space<vmem>>, vector<1x1x96xf32>
    %33 = vector.shape_cast %32 : vector<1x1x96xf32> to vector<1x96xf32>
    %34 = vector.broadcast %33 : vector<1x96xf32> to vector<5x96xf32>
    %35 = arith.addf %31, %34 : vector<5x96xf32>
    %c0_19 = arith.constant 0 : index
    %c0_20 = arith.constant 0 : index
    %c0_21 = arith.constant 0 : index
    %c0_22 = arith.constant 0 : index
    %36 = vector.load %arg16[%c0_19, %c0_20, %c0_21, %c0_22] : memref<1x4x8x32xbf16, #tpu.memory_space<vmem>>, vector<1x4x8x32xbf16>
    %37 = vector.shape_cast %36 : vector<1x4x8x32xbf16> to vector<4x8x32xbf16>
    %cst_23 = arith.constant 0.000000e+00 : f32
    %38 = vector.broadcast %cst_23 : f32 to vector<5x32xf32>
    %39 = vector.extract_strided_slice %35 {offsets = [0, 0], sizes = [5, 8], strides = [1, 1]} : vector<5x96xf32> to vector<5x8xf32>
    %40 = arith.truncf %39 : vector<5x8xf32> to vector<5x8xbf16>
    %41 = vector.extract_strided_slice %35 {offsets = [0, 32], sizes = [5, 8], strides = [1, 1]} : vector<5x96xf32> to vector<5x8xf32>
    %42 = arith.truncf %41 : vector<5x8xf32> to vector<5x8xbf16>
    %43 = vector.extract_strided_slice %35 {offsets = [0, 64], sizes = [5, 8], strides = [1, 1]} : vector<5x96xf32> to vector<5x8xf32>
    %44 = arith.truncf %43 : vector<5x8xf32> to vector<5x8xbf16>
    %cst_24 = arith.constant dense<0.000000e+00> : vector<5x5xf32>
    %45 = tpu.matmul %40, %42, %cst_24 {dimension_numbers = #tpu.dot_dimension_numbers<[1], [1], [0], [0], [0, 0, 1, 0], [], []>} : vector<5x8xbf16>, vector<5x8xbf16>, vector<5x5xf32> -> vector<5x5xf32>
    %cst_25 = arith.constant 0.353553385 : f32
    %46 = vector.broadcast %cst_25 : f32 to vector<5x5xf32>
    %47 = arith.mulf %45, %46 : vector<5x5xf32>
    %cst_26 = arith.constant dense<0xFF800000> : vector<5xf32>
    %48 = vector.multi_reduction <maximumf>, %47, %cst_26 [1] : vector<5x5xf32> to vector<5xf32>
    %49 = vector.shape_cast %48 : vector<5xf32> to vector<5x1xf32>
    %50 = vector.broadcast %49 : vector<5x1xf32> to vector<5x5xf32>
    %51 = arith.subf %47, %50 : vector<5x5xf32>
    %52 = math.exp %51 : vector<5x5xf32>
    %cst_27 = arith.constant dense<0.000000e+00> : vector<5xf32>
    %53 = vector.multi_reduction <add>, %52, %cst_27 [1] : vector<5x5xf32> to vector<5xf32>
    %54 = vector.shape_cast %53 : vector<5xf32> to vector<5x1xf32>
    %55 = tpu.reciprocal %54 {approx = true} : vector<5x1xf32> -> vector<5x1xf32>
    %56 = vector.broadcast %55 : vector<5x1xf32> to vector<5x5xf32>
    %57 = arith.mulf %52, %56 : vector<5x5xf32>
    %58 = arith.truncf %57 : vector<5x5xf32> to vector<5x5xbf16>
    %cst_28 = arith.constant dense<0.000000e+00> : vector<5x8xf32>
    %59 = tpu.matmul %58, %44, %cst_28 {dimension_numbers = #tpu.dot_dimension_numbers<[1], [0], [0], [1], [0, 0, 1, 1], [], []>} : vector<5x5xbf16>, vector<5x8xbf16>, vector<5x8xf32> -> vector<5x8xf32>
    %60 = arith.truncf %59 : vector<5x8xf32> to vector<5x8xbf16>
    %61 = vector.extract_strided_slice %37 {offsets = [0, 0, 0], sizes = [1, 8, 32], strides = [1, 1, 1]} : vector<4x8x32xbf16> to vector<1x8x32xbf16>
    %62 = vector.shape_cast %61 : vector<1x8x32xbf16> to vector<8x32xbf16>
    %cst_29 = arith.constant dense<0.000000e+00> : vector<5x32xf32>
    %63 = tpu.matmul %60, %62, %cst_29 {dimension_numbers = #tpu.dot_dimension_numbers<[1], [0], [0], [1], [0, 0, 1, 1], [], []>} : vector<5x8xbf16>, vector<8x32xbf16>, vector<5x32xf32> -> vector<5x32xf32>
    %64 = arith.addf %38, %63 : vector<5x32xf32>
    %65 = vector.extract_strided_slice %35 {offsets = [0, 8], sizes = [5, 8], strides = [1, 1]} : vector<5x96xf32> to vector<5x8xf32>
    %66 = arith.truncf %65 : vector<5x8xf32> to vector<5x8xbf16>
    %67 = vector.extract_strided_slice %35 {offsets = [0, 40], sizes = [5, 8], strides = [1, 1]} : vector<5x96xf32> to vector<5x8xf32>
    %68 = arith.truncf %67 : vector<5x8xf32> to vector<5x8xbf16>
    %69 = vector.extract_strided_slice %35 {offsets = [0, 72], sizes = [5, 8], strides = [1, 1]} : vector<5x96xf32> to vector<5x8xf32>
    %70 = arith.truncf %69 : vector<5x8xf32> to vector<5x8xbf16>
    %cst_30 = arith.constant dense<0.000000e+00> : vector<5x5xf32>
    %71 = tpu.matmul %66, %68, %cst_30 {dimension_numbers = #tpu.dot_dimension_numbers<[1], [1], [0], [0], [0, 0, 1, 0], [], []>} : vector<5x8xbf16>, vector<5x8xbf16>, vector<5x5xf32> -> vector<5x5xf32>
    %cst_31 = arith.constant 0.353553385 : f32
    %72 = vector.broadcast %cst_31 : f32 to vector<5x5xf32>
    %73 = arith.mulf %71, %72 : vector<5x5xf32>
    %cst_32 = arith.constant dense<0xFF800000> : vector<5xf32>
    %74 = vector.multi_reduction <maximumf>, %73, %cst_32 [1] : vector<5x5xf32> to vector<5xf32>
    %75 = vector.shape_cast %74 : vector<5xf32> to vector<5x1xf32>
    %76 = vector.broadcast %75 : vector<5x1xf32> to vector<5x5xf32>
    %77 = arith.subf %73, %76 : vector<5x5xf32>
    %78 = math.exp %77 : vector<5x5xf32>
    %cst_33 = arith.constant dense<0.000000e+00> : vector<5xf32>
    %79 = vector.multi_reduction <add>, %78, %cst_33 [1] : vector<5x5xf32> to vector<5xf32>
    %80 = vector.shape_cast %79 : vector<5xf32> to vector<5x1xf32>
    %81 = tpu.reciprocal %80 {approx = true} : vector<5x1xf32> -> vector<5x1xf32>
    %82 = vector.broadcast %81 : vector<5x1xf32> to vector<5x5xf32>
    %83 = arith.mulf %78, %82 : vector<5x5xf32>
    %84 = arith.truncf %83 : vector<5x5xf32> to vector<5x5xbf16>
    %cst_34 = arith.constant dense<0.000000e+00> : vector<5x8xf32>
    %85 = tpu.matmul %84, %70, %cst_34 {dimension_numbers = #tpu.dot_dimension_numbers<[1], [0], [0], [1], [0, 0, 1, 1], [], []>} : vector<5x5xbf16>, vector<5x8xbf16>, vector<5x8xf32> -> vector<5x8xf32>
    %86 = arith.truncf %85 : vector<5x8xf32> to vector<5x8xbf16>
    %87 = vector.extract_strided_slice %37 {offsets = [1, 0, 0], sizes = [1, 8, 32], strides = [1, 1, 1]} : vector<4x8x32xbf16> to vector<1x8x32xbf16>
    %88 = vector.shape_cast %87 : vector<1x8x32xbf16> to vector<8x32xbf16>
    %cst_35 = arith.constant dense<0.000000e+00> : vector<5x32xf32>
    %89 = tpu.matmul %86, %88, %cst_35 {dimension_numbers = #tpu.dot_dimension_numbers<[1], [0], [0], [1], [0, 0, 1, 1], [], []>} : vector<5x8xbf16>, vector<8x32xbf16>, vector<5x32xf32> -> vector<5x32xf32>
    %90 = arith.addf %64, %89 : vector<5x32xf32>
    %91 = vector.extract_strided_slice %35 {offsets = [0, 16], sizes = [5, 8], strides = [1, 1]} : vector<5x96xf32> to vector<5x8xf32>
    %92 = arith.truncf %91 : vector<5x8xf32> to vector<5x8xbf16>
    %93 = vector.extract_strided_slice %35 {offsets = [0, 48], sizes = [5, 8], strides = [1, 1]} : vector<5x96xf32> to vector<5x8xf32>
    %94 = arith.truncf %93 : vector<5x8xf32> to vector<5x8xbf16>
    %95 = vector.extract_strided_slice %35 {offsets = [0, 80], sizes = [5, 8], strides = [1, 1]} : vector<5x96xf32> to vector<5x8xf32>
    %96 = arith.truncf %95 : vector<5x8xf32> to vector<5x8xbf16>
    %cst_36 = arith.constant dense<0.000000e+00> : vector<5x5xf32>
    %97 = tpu.matmul %92, %94, %cst_36 {dimension_numbers = #tpu.dot_dimension_numbers<[1], [1], [0], [0], [0, 0, 1, 0], [], []>} : vector<5x8xbf16>, vector<5x8xbf16>, vector<5x5xf32> -> vector<5x5xf32>
    %cst_37 = arith.constant 0.353553385 : f32
    %98 = vector.broadcast %cst_37 : f32 to vector<5x5xf32>
    %99 = arith.mulf %97, %98 : vector<5x5xf32>
    %cst_38 = arith.constant dense<0xFF800000> : vector<5xf32>
    %100 = vector.multi_reduction <maximumf>, %99, %cst_38 [1] : vector<5x5xf32> to vector<5xf32>
    %101 = vector.shape_cast %100 : vector<5xf32> to vector<5x1xf32>
    %102 = vector.broadcast %101 : vector<5x1xf32> to vector<5x5xf32>
    %103 = arith.subf %99, %102 : vector<5x5xf32>
    %104 = math.exp %103 : vector<5x5xf32>
    %cst_39 = arith.constant dense<0.000000e+00> : vector<5xf32>
    %105 = vector.multi_reduction <add>, %104, %cst_39 [1] : vector<5x5xf32> to vector<5xf32>
    %106 = vector.shape_cast %105 : vector<5xf32> to vector<5x1xf32>
    %107 = tpu.reciprocal %106 {approx = true} : vector<5x1xf32> -> vector<5x1xf32>
    %108 = vector.broadcast %107 : vector<5x1xf32> to vector<5x5xf32>
    %109 = arith.mulf %104, %108 : vector<5x5xf32>
    %110 = arith.truncf %109 : vector<5x5xf32> to vector<5x5xbf16>
    %cst_40 = arith.constant dense<0.000000e+00> : vector<5x8xf32>
    %111 = tpu.matmul %110, %96, %cst_40 {dimension_numbers = #tpu.dot_dimension_numbers<[1], [0], [0], [1], [0, 0, 1, 1], [], []>} : vector<5x5xbf16>, vector<5x8xbf16>, vector<5x8xf32> -> vector<5x8xf32>
    %112 = arith.truncf %111 : vector<5x8xf32> to vector<5x8xbf16>
    %113 = vector.extract_strided_slice %37 {offsets = [2, 0, 0], sizes = [1, 8, 32], strides = [1, 1, 1]} : vector<4x8x32xbf16> to vector<1x8x32xbf16>
    %114 = vector.shape_cast %113 : vector<1x8x32xbf16> to vector<8x32xbf16>
    %cst_41 = arith.constant dense<0.000000e+00> : vector<5x32xf32>
    %115 = tpu.matmul %112, %114, %cst_41 {dimension_numbers = #tpu.dot_dimension_numbers<[1], [0], [0], [1], [0, 0, 1, 1], [], []>} : vector<5x8xbf16>, vector<8x32xbf16>, vector<5x32xf32> -> vector<5x32xf32>
    %116 = arith.addf %90, %115 : vector<5x32xf32>
    %117 = vector.extract_strided_slice %35 {offsets = [0, 24], sizes = [5, 8], strides = [1, 1]} : vector<5x96xf32> to vector<5x8xf32>
    %118 = arith.truncf %117 : vector<5x8xf32> to vector<5x8xbf16>
    %119 = vector.extract_strided_slice %35 {offsets = [0, 56], sizes = [5, 8], strides = [1, 1]} : vector<5x96xf32> to vector<5x8xf32>
    %120 = arith.truncf %119 : vector<5x8xf32> to vector<5x8xbf16>
    %121 = vector.extract_strided_slice %35 {offsets = [0, 88], sizes = [5, 8], strides = [1, 1]} : vector<5x96xf32> to vector<5x8xf32>
    %122 = arith.truncf %121 : vector<5x8xf32> to vector<5x8xbf16>
    %cst_42 = arith.constant dense<0.000000e+00> : vector<5x5xf32>
    %123 = tpu.matmul %118, %120, %cst_42 {dimension_numbers = #tpu.dot_dimension_numbers<[1], [1], [0], [0], [0, 0, 1, 0], [], []>} : vector<5x8xbf16>, vector<5x8xbf16>, vector<5x5xf32> -> vector<5x5xf32>
    %cst_43 = arith.constant 0.353553385 : f32
    %124 = vector.broadcast %cst_43 : f32 to vector<5x5xf32>
    %125 = arith.mulf %123, %124 : vector<5x5xf32>
    %cst_44 = arith.constant dense<0xFF800000> : vector<5xf32>
    %126 = vector.multi_reduction <maximumf>, %125, %cst_44 [1] : vector<5x5xf32> to vector<5xf32>
    %127 = vector.shape_cast %126 : vector<5xf32> to vector<5x1xf32>
    %128 = vector.broadcast %127 : vector<5x1xf32> to vector<5x5xf32>
    %129 = arith.subf %125, %128 : vector<5x5xf32>
    %130 = math.exp %129 : vector<5x5xf32>
    %cst_45 = arith.constant dense<0.000000e+00> : vector<5xf32>
    %131 = vector.multi_reduction <add>, %130, %cst_45 [1] : vector<5x5xf32> to vector<5xf32>
    %132 = vector.shape_cast %131 : vector<5xf32> to vector<5x1xf32>
    %133 = tpu.reciprocal %132 {approx = true} : vector<5x1xf32> -> vector<5x1xf32>
    %134 = vector.broadcast %133 : vector<5x1xf32> to vector<5x5xf32>
    %135 = arith.mulf %130, %134 : vector<5x5xf32>
    %136 = arith.truncf %135 : vector<5x5xf32> to vector<5x5xbf16>
    %cst_46 = arith.constant dense<0.000000e+00> : vector<5x8xf32>
    %137 = tpu.matmul %136, %122, %cst_46 {dimension_numbers = #tpu.dot_dimension_numbers<[1], [0], [0], [1], [0, 0, 1, 1], [], []>} : vector<5x5xbf16>, vector<5x8xbf16>, vector<5x8xf32> -> vector<5x8xf32>
    %138 = arith.truncf %137 : vector<5x8xf32> to vector<5x8xbf16>
    %139 = vector.extract_strided_slice %37 {offsets = [3, 0, 0], sizes = [1, 8, 32], strides = [1, 1, 1]} : vector<4x8x32xbf16> to vector<1x8x32xbf16>
    %140 = vector.shape_cast %139 : vector<1x8x32xbf16> to vector<8x32xbf16>
    %cst_47 = arith.constant dense<0.000000e+00> : vector<5x32xf32>
    %141 = tpu.matmul %138, %140, %cst_47 {dimension_numbers = #tpu.dot_dimension_numbers<[1], [0], [0], [1], [0, 0, 1, 1], [], []>} : vector<5x8xbf16>, vector<8x32xbf16>, vector<5x32xf32> -> vector<5x32xf32>
    %142 = arith.addf %116, %141 : vector<5x32xf32>
    %143 = arith.addf %3, %142 : vector<5x32xf32>
    %c0_48 = arith.constant 0 : index
    %c0_49 = arith.constant 0 : index
    %c0_50 = arith.constant 0 : index
    %144 = vector.load %arg17[%c0_48, %c0_49, %c0_50] : memref<1x1x32xf32, #tpu.memory_space<vmem>>, vector<1x1x32xf32>
    %145 = vector.shape_cast %144 : vector<1x1x32xf32> to vector<1x32xf32>
    %146 = vector.broadcast %145 : vector<1x32xf32> to vector<5x32xf32>
    %147 = arith.addf %143, %146 : vector<5x32xf32>
    %c0_51 = arith.constant 0 : index
    %c0_52 = arith.constant 0 : index
    %c0_53 = arith.constant 0 : index
    %148 = vector.load %arg12[%c0_51, %c0_52, %c0_53] : memref<1x1x32xf32, #tpu.memory_space<vmem>>, vector<1x1x32xf32>
    %149 = vector.shape_cast %148 : vector<1x1x32xf32> to vector<1x32xf32>
    %c0_54 = arith.constant 0 : index
    %c0_55 = arith.constant 0 : index
    %c0_56 = arith.constant 0 : index
    %150 = vector.load %arg13[%c0_54, %c0_55, %c0_56] : memref<1x1x32xf32, #tpu.memory_space<vmem>>, vector<1x1x32xf32>
    %151 = vector.shape_cast %150 : vector<1x1x32xf32> to vector<1x32xf32>
    %cst_57 = arith.constant dense<0.000000e+00> : vector<5xf32>
    %152 = vector.multi_reduction <add>, %147, %cst_57 [1] : vector<5x32xf32> to vector<5xf32>
    %153 = vector.shape_cast %152 : vector<5xf32> to vector<5x1xf32>
    %cst_58 = arith.constant 3.200000e+01 : f32
    %154 = vector.broadcast %cst_58 : f32 to vector<5x1xf32>
    %155 = arith.divf %153, %154 : vector<5x1xf32>
    %156 = vector.broadcast %155 : vector<5x1xf32> to vector<5x32xf32>
    %157 = arith.subf %147, %156 : vector<5x32xf32>
    %158 = arith.mulf %157, %157 : vector<5x32xf32>
    %cst_59 = arith.constant dense<0.000000e+00> : vector<5xf32>
    %159 = vector.multi_reduction <add>, %158, %cst_59 [1] : vector<5x32xf32> to vector<5xf32>
    %160 = vector.shape_cast %159 : vector<5xf32> to vector<5x1xf32>
    %cst_60 = arith.constant 3.200000e+01 : f32
    %161 = vector.broadcast %cst_60 : f32 to vector<5x1xf32>
    %162 = arith.divf %160, %161 : vector<5x1xf32>
    %cst_61 = arith.constant 9.99999974E-6 : f32
    %163 = vector.broadcast %cst_61 : f32 to vector<5x1xf32>
    %164 = arith.addf %162, %163 : vector<5x1xf32>
    %165 = math.rsqrt %164 : vector<5x1xf32>
    %166 = vector.broadcast %165 : vector<5x1xf32> to vector<5x32xf32>
    %167 = arith.mulf %157, %166 : vector<5x32xf32>
    %168 = vector.broadcast %149 : vector<1x32xf32> to vector<5x32xf32>
    %169 = arith.mulf %167, %168 : vector<5x32xf32>
    %170 = vector.broadcast %151 : vector<1x32xf32> to vector<5x32xf32>
    %171 = arith.addf %169, %170 : vector<5x32xf32>
    %172 = arith.truncf %171 : vector<5x32xf32> to vector<5x32xbf16>
    %c0_62 = arith.constant 0 : index
    %c0_63 = arith.constant 0 : index
    %c0_64 = arith.constant 0 : index
    %173 = vector.load %arg18[%c0_62, %c0_63, %c0_64] : memref<1x32x128xbf16, #tpu.memory_space<vmem>>, vector<1x32x128xbf16>
    %174 = vector.shape_cast %173 : vector<1x32x128xbf16> to vector<32x128xbf16>
    %cst_65 = arith.constant dense<0.000000e+00> : vector<5x128xf32>
    %175 = tpu.matmul %172, %174, %cst_65 {dimension_numbers = #tpu.dot_dimension_numbers<[1], [0], [0], [1], [0, 0, 1, 1], [], []>} : vector<5x32xbf16>, vector<32x128xbf16>, vector<5x128xf32> -> vector<5x128xf32>
    %c0_66 = arith.constant 0 : index
    %c0_67 = arith.constant 0 : index
    %c0_68 = arith.constant 0 : index
    %176 = vector.load %arg19[%c0_66, %c0_67, %c0_68] : memref<1x1x128xf32, #tpu.memory_space<vmem>>, vector<1x1x128xf32>
    %177 = vector.shape_cast %176 : vector<1x1x128xf32> to vector<1x128xf32>
    %178 = vector.broadcast %177 : vector<1x128xf32> to vector<5x128xf32>
    %179 = arith.addf %175, %178 : vector<5x128xf32>
    %cst_69 = arith.constant 1.702000e+00 : f32
    %180 = vector.broadcast %cst_69 : f32 to vector<5x128xf32>
    %181 = arith.mulf %180, %179 : vector<5x128xf32>
    %182 = arith.negf %181 : vector<5x128xf32>
    %183 = math.exp %182 : vector<5x128xf32>
    %cst_70 = arith.constant 1.000000e+00 : f32
    %184 = vector.broadcast %cst_70 : f32 to vector<5x128xf32>
    %185 = arith.addf %184, %183 : vector<5x128xf32>
    %186 = arith.divf %184, %185 : vector<5x128xf32>
    %187 = arith.mulf %179, %186 : vector<5x128xf32>
    %188 = arith.truncf %187 : vector<5x128xf32> to vector<5x128xbf16>
    %c0_71 = arith.constant 0 : index
    %c0_72 = arith.constant 0 : index
    %c0_73 = arith.constant 0 : index
    %189 = vector.load %arg20[%c0_71, %c0_72, %c0_73] : memref<1x128x32xbf16, #tpu.memory_space<vmem>>, vector<1x128x32xbf16>
    %190 = vector.shape_cast %189 : vector<1x128x32xbf16> to vector<128x32xbf16>
    %cst_74 = arith.constant dense<0.000000e+00> : vector<5x32xf32>
    %191 = tpu.matmul %188, %190, %cst_74 {dimension_numbers = #tpu.dot_dimension_numbers<[1], [0], [0], [1], [0, 0, 1, 1], [], []>} : vector<5x128xbf16>, vector<128x32xbf16>, vector<5x32xf32> -> vector<5x32xf32>
    %c0_75 = arith.constant 0 : index
    %c0_76 = arith.constant 0 : index
    %c0_77 = arith.constant 0 : index
    %192 = vector.load %arg21[%c0_75, %c0_76, %c0_77] : memref<1x1x32xf32, #tpu.memory_space<vmem>>, vector<1x1x32xf32>
    %193 = vector.shape_cast %192 : vector<1x1x32xf32> to vector<1x32xf32>
    %194 = vector.broadcast %193 : vector<1x32xf32> to vector<5x32xf32>
    %195 = arith.addf %191, %194 : vector<5x32xf32>
    %196 = arith.addf %147, %195 : vector<5x32xf32>
    %c0_78 = arith.constant 0 : index
    %c0_79 = arith.constant 0 : index
    %197 = vector.load %arg23[%c0_78, %c0_79] : memref<5x32xf32, #tpu.memory_space<vmem>>, vector<5x32xf32>
    tpu.vector_store %arg23[%c0_78, %c0_79], %196 {strides = array<i32>} : memref<5x32xf32, #tpu.memory_space<vmem>>, vector<5x32xf32>,
    %c1_i32 = arith.constant 1 : i32
    %198 = arith.cmpi eq, %arg1, %c1_i32 : i32
    %199 = arith.extui %198 : i1 to i32
    %c0_i32_80 = arith.constant 0 : i32
    %200 = arith.cmpi ne, %199, %c0_i32_80 : i32
    scf.if %200 {
      %201 = vector.extract_strided_slice %196 {offsets = [1, 0], sizes = [4, 32], strides = [1, 1]} : vector<5x32xf32> to vector<4x32xf32>
      %c0_81 = arith.constant 0 : index
      %c0_82 = arith.constant 0 : index
      %202 = vector.load %arg8[%c0_81, %c0_82] : memref<1x32xf32, #tpu.memory_space<vmem>>, vector<1x32xf32>
      %c0_83 = arith.constant 0 : index
      %c0_84 = arith.constant 0 : index
      %203 = vector.load %arg9[%c0_83, %c0_84] : memref<1x32xf32, #tpu.memory_space<vmem>>, vector<1x32xf32>
      %cst_85 = arith.constant dense<0.000000e+00> : vector<4xf32>
      %204 = vector.multi_reduction <add>, %201, %cst_85 [1] : vector<4x32xf32> to vector<4xf32>
      %205 = vector.shape_cast %204 : vector<4xf32> to vector<4x1xf32>
      %cst_86 = arith.constant 3.200000e+01 : f32
      %206 = vector.broadcast %cst_86 : f32 to vector<4x1xf32>
      %207 = arith.divf %205, %206 : vector<4x1xf32>
      %208 = vector.broadcast %207 : vector<4x1xf32> to vector<4x32xf32>
      %209 = arith.subf %201, %208 : vector<4x32xf32>
      %210 = arith.mulf %209, %209 : vector<4x32xf32>
      %cst_87 = arith.constant dense<0.000000e+00> : vector<4xf32>
      %211 = vector.multi_reduction <add>, %210, %cst_87 [1] : vector<4x32xf32> to vector<4xf32>
      %212 = vector.shape_cast %211 : vector<4xf32> to vector<4x1xf32>
      %cst_88 = arith.constant 3.200000e+01 : f32
      %213 = vector.broadcast %cst_88 : f32 to vector<4x1xf32>
      %214 = arith.divf %212, %213 : vector<4x1xf32>
      %cst_89 = arith.constant 9.99999974E-6 : f32
      %215 = vector.broadcast %cst_89 : f32 to vector<4x1xf32>
      %216 = arith.addf %214, %215 : vector<4x1xf32>
      %217 = math.rsqrt %216 : vector<4x1xf32>
      %218 = vector.broadcast %217 : vector<4x1xf32> to vector<4x32xf32>
      %219 = arith.mulf %209, %218 : vector<4x32xf32>
      %220 = vector.broadcast %202 : vector<1x32xf32> to vector<4x32xf32>
      %221 = arith.mulf %219, %220 : vector<4x32xf32>
      %222 = vector.broadcast %203 : vector<1x32xf32> to vector<4x32xf32>
      %223 = arith.addf %221, %222 : vector<4x32xf32>
      %c0_90 = arith.constant 0 : index
      %c0_91 = arith.constant 0 : index
      %c0_92 = arith.constant 0 : index
      %224 = vector.load %arg22[%c0_90, %c0_91, %c0_92] : memref<1x4x32xf32, #tpu.memory_space<vmem>>, vector<1x4x32xf32>
      %225 = vector.shape_cast %224 : vector<1x4x32xf32> to vector<4x32xf32>
      %226 = vector.shape_cast %223 : vector<4x32xf32> to vector<1x4x32xf32>
      tpu.vector_store %arg22[%c0_90, %c0_91, %c0_92], %226 {strides = array<i32>} : memref<1x4x32xf32, #tpu.memory_space<vmem>>, vector<1x4x32xf32>,
    } else {
    }
    return
  }
  func.func @transform_0(%arg0: i32, %arg1: i32) -> (i32, i32, i32) {
    %c0_i32 = arith.constant 0 : i32
    %c0_i32_0 = arith.constant 0 : i32
    %c0_i32_1 = arith.constant 0 : i32
    return %arg0, %c0_i32, %c0_i32_0 : i32, i32, i32
  }
  func.func @transform_1(%arg0: i32, %arg1: i32) -> (i32, i32) {
    %c0_i32 = arith.constant 0 : i32
    %c0_i32_0 = arith.constant 0 : i32
    %c0_i32_1 = arith.constant 0 : i32
    return %c0_i32, %c0_i32_0 : i32, i32
  }
  func.func @transform_2(%arg0: i32, %arg1: i32) -> (i32, i32) {
    %c0_i32 = arith.constant 0 : i32
    %c0_i32_0 = arith.constant 0 : i32
    %c0_i32_1 = arith.constant 0 : i32
    return %c0_i32, %c0_i32_0 : i32, i32
  }
  func.func @transform_3(%arg0: i32, %arg1: i32) -> (i32, i32) {
    %c0_i32 = arith.constant 0 : i32
    %c0_i32_0 = arith.constant 0 : i32
    %c0_i32_1 = arith.constant 0 : i32
    return %c0_i32, %c0_i32_0 : i32, i32
  }
  func.func @transform_4(%arg0: i32, %arg1: i32) -> (i32, i32) {
    %c0_i32 = arith.constant 0 : i32
    %c0_i32_0 = arith.constant 0 : i32
    %c0_i32_1 = arith.constant 0 : i32
    return %c0_i32, %c0_i32_0 : i32, i32
  }
  func.func @transform_5(%arg0: i32, %arg1: i32) -> (i32, i32) {
    %c0_i32 = arith.constant 0 : i32
    %c0_i32_0 = arith.constant 0 : i32
    %c0_i32_1 = arith.constant 0 : i32
    return %c0_i32, %c0_i32_0 : i32, i32
  }
  func.func @transform_6(%arg0: i32, %arg1: i32) -> (i32, i32) {
    %c0_i32 = arith.constant 0 : i32
    %c0_i32_0 = arith.constant 0 : i32
    %c0_i32_1 = arith.constant 0 : i32
    return %c0_i32, %c0_i32_0 : i32, i32
  }
  func.func @transform_7(%arg0: i32, %arg1: i32) -> (i32, i32) {
    %c0_i32 = arith.constant 0 : i32
    %c0_i32_0 = arith.constant 0 : i32
    %c0_i32_1 = arith.constant 0 : i32
    return %c0_i32, %c0_i32_0 : i32, i32
  }
  func.func @transform_8(%arg0: i32, %arg1: i32) -> (i32, i32, i32) {
    %c0_i32 = arith.constant 0 : i32
    %c0_i32_0 = arith.constant 0 : i32
    %c0_i32_1 = arith.constant 0 : i32
    return %arg1, %c0_i32, %c0_i32_0 : i32, i32, i32
  }
  func.func @transform_9(%arg0: i32, %arg1: i32) -> (i32, i32, i32) {
    %c0_i32 = arith.constant 0 : i32
    %c0_i32_0 = arith.constant 0 : i32
    %c0_i32_1 = arith.constant 0 : i32
    return %arg1, %c0_i32, %c0_i32_0 : i32, i32, i32
  }
  func.func @transform_10(%arg0: i32, %arg1: i32) -> (i32, i32, i32) {
    %c0_i32 = arith.constant 0 : i32
    %c0_i32_0 = arith.constant 0 : i32
    %c0_i32_1 = arith.constant 0 : i32
    return %arg1, %c0_i32, %c0_i32_0 : i32, i32, i32
  }
  func.func @transform_11(%arg0: i32, %arg1: i32) -> (i32, i32, i32) {
    %c0_i32 = arith.constant 0 : i32
    %c0_i32_0 = arith.constant 0 : i32
    %c0_i32_1 = arith.constant 0 : i32
    return %arg1, %c0_i32, %c0_i32_0 : i32, i32, i32
  }
  func.func @transform_12(%arg0: i32, %arg1: i32) -> (i32, i32, i32) {
    %c0_i32 = arith.constant 0 : i32
    %c0_i32_0 = arith.constant 0 : i32
    %c0_i32_1 = arith.constant 0 : i32
    return %arg1, %c0_i32, %c0_i32_0 : i32, i32, i32
  }
  func.func @transform_13(%arg0: i32, %arg1: i32) -> (i32, i32, i32) {
    %c0_i32 = arith.constant 0 : i32
    %c0_i32_0 = arith.constant 0 : i32
    %c0_i32_1 = arith.constant 0 : i32
    return %arg1, %c0_i32, %c0_i32_0 : i32, i32, i32
  }
  func.func @transform_14(%arg0: i32, %arg1: i32) -> (i32, i32, i32, i32) {
    %c0_i32 = arith.constant 0 : i32
    %c0_i32_0 = arith.constant 0 : i32
    %c0_i32_1 = arith.constant 0 : i32
    %c0_i32_2 = arith.constant 0 : i32
    return %arg1, %c0_i32, %c0_i32_0, %c0_i32_1 : i32, i32, i32, i32
  }
  func.func @transform_15(%arg0: i32, %arg1: i32) -> (i32, i32, i32) {
    %c0_i32 = arith.constant 0 : i32
    %c0_i32_0 = arith.constant 0 : i32
    %c0_i32_1 = arith.constant 0 : i32
    return %arg1, %c0_i32, %c0_i32_0 : i32, i32, i32
  }
  func.func @transform_16(%arg0: i32, %arg1: i32) -> (i32, i32, i32) {
    %c0_i32 = arith.constant 0 : i32
    %c0_i32_0 = arith.constant 0 : i32
    %c0_i32_1 = arith.constant 0 : i32
    return %arg1, %c0_i32, %c0_i32_0 : i32, i32, i32
  }
  func.func @transform_17(%arg0: i32, %arg1: i32) -> (i32, i32, i32) {
    %c0_i32 = arith.constant 0 : i32
    %c0_i32_0 = arith.constant 0 : i32
    %c0_i32_1 = arith.constant 0 : i32
    return %arg1, %c0_i32, %c0_i32_0 : i32, i32, i32
  }
  func.func @transform_18(%arg0: i32, %arg1: i32) -> (i32, i32, i32) {
    %c0_i32 = arith.constant 0 : i32
    %c0_i32_0 = arith.constant 0 : i32
    %c0_i32_1 = arith.constant 0 : i32
    return %arg1, %c0_i32, %c0_i32_0 : i32, i32, i32
  }
  func.func @transform_19(%arg0: i32, %arg1: i32) -> (i32, i32, i32) {
    %c0_i32 = arith.constant 0 : i32
    %c0_i32_0 = arith.constant 0 : i32
    %c0_i32_1 = arith.constant 0 : i32
    return %arg1, %c0_i32, %c0_i32_0 : i32, i32, i32
  }
  func.func @transform_20(%arg0: i32, %arg1: i32) -> (i32, i32, i32) {
    %c0_i32 = arith.constant 0 : i32
    %c0_i32_0 = arith.constant 0 : i32
    %c0_i32_1 = arith.constant 0 : i32
    return %arg0, %c0_i32, %c0_i32_0 : i32, i32, i32
  }
}

</mosaic_0001>

<llo_original>
// kernel: image_encoder_forward.1
$region0: #{image_encoder_forward.1}
  #allocation0 [shape = 'u32[]', space=smem, size = 0x4, offset = 0x4, fixed_abs, tag = 'smem constant byte address 0x4 - core index']
  #allocation1 [shape = 'u32[72,128]{1,0:T(1,128)}', space=vmem, size = 0x9000, scoped, tag = 'internal scratch']
  #allocation2 [shape = 'f32[5,32]{1,0:T(8,128)}', space=vmem, size = 0x1000, scoped, tag = 'scratch operand']
  %s0 = inlined_call_operand.vmem [shape: bf16[2,4,192], index: 0, kind: input, shape index: {}]
  %s1 = inlined_call_operand.vmem [shape: bf16[192,32], index: 1, kind: input, shape index: {}]
  %s2 = inlined_call_operand.vmem [shape: f32[1,32], index: 2, kind: input, shape index: {}]
  %s3 = inlined_call_operand.vmem [shape: f32[5,32], index: 3, kind: input, shape index: {}]
  %s4 = inlined_call_operand.vmem [shape: f32[1,32], index: 4, kind: input, shape index: {}]
  %s5 = inlined_call_operand.vmem [shape: f32[1,32], index: 5, kind: input, shape index: {}]
  %s6 = inlined_call_operand.vmem [shape: f32[1,32], index: 6, kind: input, shape index: {}]
  %s7 = inlined_call_operand.vmem [shape: f32[1,32], index: 7, kind: input, shape index: {}]
  %s8 = inlined_call_operand.vmem [shape: f32[2,1,32], index: 8, kind: input, shape index: {}]
  %s9 = inlined_call_operand.vmem [shape: f32[2,1,32], index: 9, kind: input, shape index: {}]
  %s10 = inlined_call_operand.vmem [shape: f32[2,1,32], index: 10, kind: input, shape index: {}]
  %s11 = inlined_call_operand.vmem [shape: f32[2,1,32], index: 11, kind: input, shape index: {}]
  %s12 = inlined_call_operand.vmem [shape: bf16[2,32,96], index: 12, kind: input, shape index: {}]
  %s13 = inlined_call_operand.vmem [shape: f32[2,1,96], index: 13, kind: input, shape index: {}]
  %s14 = inlined_call_operand.vmem [shape: bf16[2,4,8,32], index: 14, kind: input, shape index: {}]
  %s15 = inlined_call_operand.vmem [shape: f32[2,1,32], index: 15, kind: input, shape index: {}]
  %s16 = inlined_call_operand.vmem [shape: bf16[2,32,128], index: 16, kind: input, shape index: {}]
  %s17 = inlined_call_operand.vmem [shape: f32[2,1,128], index: 17, kind: input, shape index: {}]
  %s18 = inlined_call_operand.vmem [shape: bf16[2,128,32], index: 18, kind: input, shape index: {}]
  %s19 = inlined_call_operand.vmem [shape: f32[2,1,32], index: 19, kind: input, shape index: {}]
  %s20 = inlined_call_operand.hbm [shape: f32[2,4,32], index: 20, kind: output, shape index: {}]
  %s21 = sld [smem:[#allocation0]]
  $region121: #{image_encoder_forward.1} parent=0
    _
  %s23 = ssub.s32 1, %s21
  %s24 = scalar_select 0, %s23, %s21
  $region1: #{image_encoder_forward.1} parent=0
    #allocation3 [shape = 'u8[4096]{0}', space=vmem, size = 0x1000, scoped, tag = 'output window, operand 0']
    #allocation4 [shape = 's32[2]{0}', space=sflag, size = 0x8, scoped, tag = 'scoped memory for image_encoder_forward.1']
    %25 = vsyncpa [#allocation4], 0
    %s26 = scalar_lea.sflag [#allocation4], 1
    %27 = vsyncpa %s26, 0
    loop: start=0, step=1, limit=6
    $region2: #{image_encoder_forward.1} parent=1 // loop_pre_header
      _
    $region3: #{image_encoder_forward.1} parent=1 // loop_header
      %s29 = sphi 0, %s33
      %p30 = scmp.ge.s32.totalorder %s29, 6
      %s36 = sphi 0, %s48
      %s37 = sphi 0, %s44
      %s38 = sphi 0, %s36
      %s39 = sphi 0, %s37
      %s40 = sphi 0, %s38
      %s41 = sphi 0, %s39
      %s51 = sphi 0, %s53
      %s54 = sphi 0, %s51
      %s55 = sphi 0, %s54
      %s71 = sphi 0, %s55
      %s75 = sphi 0, %s75
      %s77 = sphi 0, %s75
      %s78 = sphi 0, %s77
      %s92 = sphi 0, %s78
      %s96 = sphi 0, %s96
      %s98 = sphi 0, %s96
      %s99 = sphi 0, %s98
      %s113 = sphi 0, %s99
      %s117 = sphi 0, %s117
      %s119 = sphi 0, %s117
      %s120 = sphi 0, %s119
      %s134 = sphi 0, %s120
      %s138 = sphi 0, %s138
      %s140 = sphi 0, %s138
      %s141 = sphi 0, %s140
      %s155 = sphi 0, %s141
      %s159 = sphi 0, %s159
      %s161 = sphi 0, %s159
      %s162 = sphi 0, %s161
      %s176 = sphi 0, %s162
      %s180 = sphi 0, %s180
      %s182 = sphi 0, %s180
      %s183 = sphi 0, %s182
      %s197 = sphi 0, %s183
      %s201 = sphi 0, %s201
      %s203 = sphi 0, %s201
      %s204 = sphi 0, %s203
      %s218 = sphi 0, %s204
      %s224 = sphi 0, %s226
      %s227 = sphi 0, %s224
      %s228 = sphi 0, %s227
      %s244 = sphi 0, %s228
      %s250 = sphi 0, %s252
      %s253 = sphi 0, %s250
      %s254 = sphi 0, %s253
      %s270 = sphi 0, %s254
      %s276 = sphi 0, %s278
      %s279 = sphi 0, %s276
      %s280 = sphi 0, %s279
      %s296 = sphi 0, %s280
      %s302 = sphi 0, %s304
      %s305 = sphi 0, %s302
      %s306 = sphi 0, %s305
      %s322 = sphi 0, %s306
      %s328 = sphi 0, %s330
      %s331 = sphi 0, %s328
      %s332 = sphi 0, %s331
      %s348 = sphi 0, %s332
      %s354 = sphi 0, %s356
      %s357 = sphi 0, %s354
      %s358 = sphi 0, %s357
      %s374 = sphi 0, %s358
      %s380 = sphi 0, %s382
      %s383 = sphi 0, %s380
      %s384 = sphi 0, %s383
      %s400 = sphi 0, %s384
      %s406 = sphi 0, %s408
      %s409 = sphi 0, %s406
      %s410 = sphi 0, %s409
      %s426 = sphi 0, %s410
      %s432 = sphi 0, %s434
      %s435 = sphi 0, %s432
      %s436 = sphi 0, %s435
      %s452 = sphi 0, %s436
      %s458 = sphi 0, %s460
      %s461 = sphi 0, %s458
      %s462 = sphi 0, %s461
      %s478 = sphi 0, %s462
      %s484 = sphi 0, %s486
      %s487 = sphi 0, %s484
      %s488 = sphi 0, %s487
      %s504 = sphi 0, %s488
      %s510 = sphi 0, %s512
      %s513 = sphi 0, %s510
      %s514 = sphi 0, %s513
      %s530 = sphi 0, %s514
      %s536 = sphi 0, %s538
      %s539 = sphi 0, %s536
      %s540 = sphi 0, %s539
      %s556 = sphi 0, %s540
    $region4: #{image_encoder_forward.1} parent=1 // loop_header_branch
      %32 = sbr.rel (%p30) target = $region8
    $region5: #{image_encoder_forward.1} parent=1 // loop_body
      %s34 = ssub.s32 %s29, 1
      %s35 = ssub.s32 %s29, 2
      %s42 = sadd.s32 1, %s37
      %p43 = scmp.ge.s32.totalorder %s42, 2
      %s44 = scalar_select %p43, 0, %s42
      %s45 = sadd.s32 1, %s36
      %s46 = scalar_select %p43, %s45, %s36
      %p47 = scmp.ge.s32.totalorder %s46, 2
      %s48 = scalar_select %p47, 0, %s46
      %s49 = ssub.s32 %s36, %s48
      %p50 = scmp.eq.s32.totalorder %s49, 0
      %s52 = sadd.s32 %s51, 1
      %s53 = scalar_select %p50, %s51, %s52
      %p56 = pneg %p50
      %p57 = scmp.eq.s32.totalorder %s29, 3
      %p58 = por %p56, %p57
      %p59 = scmp.ne.s32.totalorder %s51, %s54
      %p60 = scmp.eq.s32.totalorder %s29, 0
      %p61 = por %p59, %p60
      %p62 = scmp.ne.s32.totalorder %s51, %s54
      %p63 = scmp.eq.s32.totalorder %s34, 3
      %p64 = por %p62, %p63
      %p65 = scmp.ne.s32.totalorder %s54, %s55
      %p66 = scmp.eq.s32.totalorder %s34, 0
      %p67 = por %p65, %p66
      %p68 = scmp.ne.s32.totalorder %s54, %s55
      %p69 = scmp.eq.s32.totalorder %s35, 3
      %p70 = por %p68, %p69
      %p72 = scmp.ne.s32.totalorder %s55, %s71
      %p73 = scmp.eq.s32.totalorder %s35, 0
      %p74 = por %p72, %p73
      %s76 = sadd.s32 %s75, 1
      %p79 = scmp.eq.s32.totalorder %s29, 3
      %p80 = scmp.ne.s32.totalorder %s75, %s77
      %p81 = scmp.eq.s32.totalorder %s29, 0
      %p82 = por %p80, %p81
      %p83 = scmp.ne.s32.totalorder %s75, %s77
      %p84 = scmp.eq.s32.totalorder %s34, 3
      %p85 = por %p83, %p84
      %p86 = scmp.ne.s32.totalorder %s77, %s78
      %p87 = scmp.eq.s32.totalorder %s34, 0
      %p88 = por %p86, %p87
      %p89 = scmp.ne.s32.totalorder %s77, %s78
      %p90 = scmp.eq.s32.totalorder %s35, 3
      %p91 = por %p89, %p90
      %p93 = scmp.ne.s32.totalorder %s78, %s92
      %p94 = scmp.eq.s32.totalorder %s35, 0
      %p95 = por %p93, %p94
      %s97 = sadd.s32 %s96, 1
      %p100 = scmp.eq.s32.totalorder %s29, 3
      %p101 = scmp.ne.s32.totalorder %s96, %s98
      %p102 = scmp.eq.s32.totalorder %s29, 0
      %p103 = por %p101, %p102
      %p104 = scmp.ne.s32.totalorder %s96, %s98
      %p105 = scmp.eq.s32.totalorder %s34, 3
      %p106 = por %p104, %p105
      %p107 = scmp.ne.s32.totalorder %s98, %s99
      %p108 = scmp.eq.s32.totalorder %s34, 0
      %p109 = por %p107, %p108
      %p110 = scmp.ne.s32.totalorder %s98, %s99
      %p111 = scmp.eq.s32.totalorder %s35, 3
      %p112 = por %p110, %p111
      %p114 = scmp.ne.s32.totalorder %s99, %s113
      %p115 = scmp.eq.s32.totalorder %s35, 0
      %p116 = por %p114, %p115
      %s118 = sadd.s32 %s117, 1
      %p121 = scmp.eq.s32.totalorder %s29, 3
      %p122 = scmp.ne.s32.totalorder %s117, %s119
      %p123 = scmp.eq.s32.totalorder %s29, 0
      %p124 = por %p122, %p123
      %p125 = scmp.ne.s32.totalorder %s117, %s119
      %p126 = scmp.eq.s32.totalorder %s34, 3
      %p127 = por %p125, %p126
      %p128 = scmp.ne.s32.totalorder %s119, %s120
      %p129 = scmp.eq.s32.totalorder %s34, 0
      %p130 = por %p128, %p129
      %p131 = scmp.ne.s32.totalorder %s119, %s120
      %p132 = scmp.eq.s32.totalorder %s35, 3
      %p133 = por %p131, %p132
      %p135 = scmp.ne.s32.totalorder %s120, %s134
      %p136 = scmp.eq.s32.totalorder %s35, 0
      %p137 = por %p135, %p136
      %s139 = sadd.s32 %s138, 1
      %p142 = scmp.eq.s32.totalorder %s29, 3
      %p143 = scmp.ne.s32.totalorder %s138, %s140
      %p144 = scmp.eq.s32.totalorder %s29, 0
      %p145 = por %p143, %p144
      %p146 = scmp.ne.s32.totalorder %s138, %s140
      %p147 = scmp.eq.s32.totalorder %s34, 3
      %p148 = por %p146, %p147
      %p149 = scmp.ne.s32.totalorder %s140, %s141
      %p150 = scmp.eq.s32.totalorder %s34, 0
      %p151 = por %p149, %p150
      %p152 = scmp.ne.s32.totalorder %s140, %s141
      %p153 = scmp.eq.s32.totalorder %s35, 3
      %p154 = por %p152, %p153
      %p156 = scmp.ne.s32.totalorder %s141, %s155
      %p157 = scmp.eq.s32.totalorder %s35, 0
      %p158 = por %p156, %p157
      %s160 = sadd.s32 %s159, 1
      %p163 = scmp.eq.s32.totalorder %s29, 3
      %p164 = scmp.ne.s32.totalorder %s159, %s161
      %p165 = scmp.eq.s32.totalorder %s29, 0
      %p166 = por %p164, %p165
      %p167 = scmp.ne.s32.totalorder %s159, %s161
      %p168 = scmp.eq.s32.totalorder %s34, 3
      %p169 = por %p167, %p168
      %p170 = scmp.ne.s32.totalorder %s161, %s162
      %p171 = scmp.eq.s32.totalorder %s34, 0
      %p172 = por %p170, %p171
      %p173 = scmp.ne.s32.totalorder %s161, %s162
      %p174 = scmp.eq.s32.totalorder %s35, 3
      %p175 = por %p173, %p174
      %p177 = scmp.ne.s32.totalorder %s162, %s176
      %p178 = scmp.eq.s32.totalorder %s35, 0
      %p179 = por %p177, %p178
      %s181 = sadd.s32 %s180, 1
      %p184 = scmp.eq.s32.totalorder %s29, 3
      %p185 = scmp.ne.s32.totalorder %s180, %s182
      %p186 = scmp.eq.s32.totalorder %s29, 0
      %p187 = por %p185, %p186
      %p188 = scmp.ne.s32.totalorder %s180, %s182
      %p189 = scmp.eq.s32.totalorder %s34, 3
      %p190 = por %p188, %p189
      %p191 = scmp.ne.s32.totalorder %s182, %s183
      %p192 = scmp.eq.s32.totalorder %s34, 0
      %p193 = por %p191, %p192
      %p194 = scmp.ne.s32.totalorder %s182, %s183
      %p195 = scmp.eq.s32.totalorder %s35, 3
      %p196 = por %p194, %p195
      %p198 = scmp.ne.s32.totalorder %s183, %s197
      %p199 = scmp.eq.s32.totalorder %s35, 0
      %p200 = por %p198, %p199
      %s202 = sadd.s32 %s201, 1
      %p205 = scmp.eq.s32.totalorder %s29, 3
      %p206 = scmp.ne.s32.totalorder %s201, %s203
      %p207 = scmp.eq.s32.totalorder %s29, 0
      %p208 = por %p206, %p207
      %p209 = scmp.ne.s32.totalorder %s201, %s203
      %p210 = scmp.eq.s32.totalorder %s34, 3
      %p211 = por %p209, %p210
      %p212 = scmp.ne.s32.totalorder %s203, %s204
      %p213 = scmp.eq.s32.totalorder %s34, 0
      %p214 = por %p212, %p213
      %p215 = scmp.ne.s32.totalorder %s203, %s204
      %p216 = scmp.eq.s32.totalorder %s35, 3
      %p217 = por %p215, %p216
      %p219 = scmp.ne.s32.totalorder %s204, %s218
      %p220 = scmp.eq.s32.totalorder %s35, 0
      %p221 = por %p219, %p220
      %s222 = ssub.s32 %s37, %s44
      %p223 = scmp.eq.s32.totalorder %s222, 0
      %s225 = sadd.s32 %s224, 1
      %s226 = scalar_select %p223, %s224, %s225
      %p229 = pneg %p223
      %p230 = scmp.eq.s32.totalorder %s29, 3
      %p231 = por %p229, %p230
      %p232 = scmp.ne.s32.totalorder %s224, %s227
      %p233 = scmp.eq.s32.totalorder %s29, 0
      %p234 = por %p232, %p233
      %p235 = scmp.ne.s32.totalorder %s224, %s227
      %p236 = scmp.eq.s32.totalorder %s34, 3
      %p237 = por %p235, %p236
      %p238 = scmp.ne.s32.totalorder %s227, %s228
      %p239 = scmp.eq.s32.totalorder %s34, 0
      %p240 = por %p238, %p239
      %p241 = scmp.ne.s32.totalorder %s227, %s228
      %p242 = scmp.eq.s32.totalorder %s35, 3
      %p243 = por %p241, %p242
      %p245 = scmp.ne.s32.totalorder %s228, %s244
      %p246 = scmp.eq.s32.totalorder %s35, 0
      %p247 = por %p245, %p246
      %s248 = ssub.s32 %s37, %s44
      %p249 = scmp.eq.s32.totalorder %s248, 0
      %s251 = sadd.s32 %s250, 1
      %s252 = scalar_select %p249, %s250, %s251
      %p255 = pneg %p249
      %p256 = scmp.eq.s32.totalorder %s29, 3
      %p257 = por %p255, %p256
      %p258 = scmp.ne.s32.totalorder %s250, %s253
      %p259 = scmp.eq.s32.totalorder %s29, 0
      %p260 = por %p258, %p259
      %p261 = scmp.ne.s32.totalorder %s250, %s253
      %p262 = scmp.eq.s32.totalorder %s34, 3
      %p263 = por %p261, %p262
      %p264 = scmp.ne.s32.totalorder %s253, %s254
      %p265 = scmp.eq.s32.totalorder %s34, 0
      %p266 = por %p264, %p265
      %p267 = scmp.ne.s32.totalorder %s253, %s254
      %p268 = scmp.eq.s32.totalorder %s35, 3
      %p269 = por %p267, %p268
      %p271 = scmp.ne.s32.totalorder %s254, %s270
      %p272 = scmp.eq.s32.totalorder %s35, 0
      %p273 = por %p271, %p272
      %s274 = ssub.s32 %s37, %s44
      %p275 = scmp.eq.s32.totalorder %s274, 0
      %s277 = sadd.s32 %s276, 1
      %s278 = scalar_select %p275, %s276, %s277
      %p281 = pneg %p275
      %p282 = scmp.eq.s32.totalorder %s29, 3
      %p283 = por %p281, %p282
      %p284 = scmp.ne.s32.totalorder %s276, %s279
      %p285 = scmp.eq.s32.totalorder %s29, 0
      %p286 = por %p284, %p285
      %p287 = scmp.ne.s32.totalorder %s276, %s279
      %p288 = scmp.eq.s32.totalorder %s34, 3
      %p289 = por %p287, %p288
      %p290 = scmp.ne.s32.totalorder %s279, %s280
      %p291 = scmp.eq.s32.totalorder %s34, 0
      %p292 = por %p290, %p291
      %p293 = scmp.ne.s32.totalorder %s279, %s280
      %p294 = scmp.eq.s32.totalorder %s35, 3
      %p295 = por %p293, %p294
      %p297 = scmp.ne.s32.totalorder %s280, %s296
      %p298 = scmp.eq.s32.totalorder %s35, 0
      %p299 = por %p297, %p298
      %s300 = ssub.s32 %s37, %s44
      %p301 = scmp.eq.s32.totalorder %s300, 0
      %s303 = sadd.s32 %s302, 1
      %s304 = scalar_select %p301, %s302, %s303
      %p307 = pneg %p301
      %p308 = scmp.eq.s32.totalorder %s29, 3
      %p309 = por %p307, %p308
      %p310 = scmp.ne.s32.totalorder %s302, %s305
      %p311 = scmp.eq.s32.totalorder %s29, 0
      %p312 = por %p310, %p311
      %p313 = scmp.ne.s32.totalorder %s302, %s305
      %p314 = scmp.eq.s32.totalorder %s34, 3
      %p315 = por %p313, %p314
      %p316 = scmp.ne.s32.totalorder %s305, %s306
      %p317 = scmp.eq.s32.totalorder %s34, 0
      %p318 = por %p316, %p317
      %p319 = scmp.ne.s32.totalorder %s305, %s306
      %p320 = scmp.eq.s32.totalorder %s35, 3
      %p321 = por %p319, %p320
      %p323 = scmp.ne.s32.totalorder %s306, %s322
      %p324 = scmp.eq.s32.totalorder %s35, 0
      %p325 = por %p323, %p324
      %s326 = ssub.s32 %s37, %s44
      %p327 = scmp.eq.s32.totalorder %s326, 0
      %s329 = sadd.s32 %s328, 1
      %s330 = scalar_select %p327, %s328, %s329
      %p333 = pneg %p327
      %p334 = scmp.eq.s32.totalorder %s29, 3
      %p335 = por %p333, %p334
      %p336 = scmp.ne.s32.totalorder %s328, %s331
      %p337 = scmp.eq.s32.totalorder %s29, 0
      %p338 = por %p336, %p337
      %p339 = scmp.ne.s32.totalorder %s328, %s331
      %p340 = scmp.eq.s32.totalorder %s34, 3
      %p341 = por %p339, %p340
      %p342 = scmp.ne.s32.totalorder %s331, %s332
      %p343 = scmp.eq.s32.totalorder %s34, 0
      %p344 = por %p342, %p343
      %p345 = scmp.ne.s32.totalorder %s331, %s332
      %p346 = scmp.eq.s32.totalorder %s35, 3
      %p347 = por %p345, %p346
      %p349 = scmp.ne.s32.totalorder %s332, %s348
      %p350 = scmp.eq.s32.totalorder %s35, 0
      %p351 = por %p349, %p350
      %s352 = ssub.s32 %s37, %s44
      %p353 = scmp.eq.s32.totalorder %s352, 0
      %s355 = sadd.s32 %s354, 1
      %s356 = scalar_select %p353, %s354, %s355
      %p359 = pneg %p353
      %p360 = scmp.eq.s32.totalorder %s29, 3
      %p361 = por %p359, %p360
      %p362 = scmp.ne.s32.totalorder %s354, %s357
      %p363 = scmp.eq.s32.totalorder %s29, 0
      %p364 = por %p362, %p363
      %p365 = scmp.ne.s32.totalorder %s354, %s357
      %p366 = scmp.eq.s32.totalorder %s34, 3
      %p367 = por %p365, %p366
      %p368 = scmp.ne.s32.totalorder %s357, %s358
      %p369 = scmp.eq.s32.totalorder %s34, 0
      %p370 = por %p368, %p369
      %p371 = scmp.ne.s32.totalorder %s357, %s358
      %p372 = scmp.eq.s32.totalorder %s35, 3
      %p373 = por %p371, %p372
      %p375 = scmp.ne.s32.totalorder %s358, %s374
      %p376 = scmp.eq.s32.totalorder %s35, 0
      %p377 = por %p375, %p376
      %s378 = ssub.s32 %s37, %s44
      %p379 = scmp.eq.s32.totalorder %s378, 0
      %s381 = sadd.s32 %s380, 1
      %s382 = scalar_select %p379, %s380, %s381
      %p385 = pneg %p379
      %p386 = scmp.eq.s32.totalorder %s29, 3
      %p387 = por %p385, %p386
      %p388 = scmp.ne.s32.totalorder %s380, %s383
      %p389 = scmp.eq.s32.totalorder %s29, 0
      %p390 = por %p388, %p389
      %p391 = scmp.ne.s32.totalorder %s380, %s383
      %p392 = scmp.eq.s32.totalorder %s34, 3
      %p393 = por %p391, %p392
      %p394 = scmp.ne.s32.totalorder %s383, %s384
      %p395 = scmp.eq.s32.totalorder %s34, 0
      %p396 = por %p394, %p395
      %p397 = scmp.ne.s32.totalorder %s383, %s384
      %p398 = scmp.eq.s32.totalorder %s35, 3
      %p399 = por %p397, %p398
      %p401 = scmp.ne.s32.totalorder %s384, %s400
      %p402 = scmp.eq.s32.totalorder %s35, 0
      %p403 = por %p401, %p402
      %s404 = ssub.s32 %s37, %s44
      %p405 = scmp.eq.s32.totalorder %s404, 0
      %s407 = sadd.s32 %s406, 1
      %s408 = scalar_select %p405, %s406, %s407
      %p411 = pneg %p405
      %p412 = scmp.eq.s32.totalorder %s29, 3
      %p413 = por %p411, %p412
      %p414 = scmp.ne.s32.totalorder %s406, %s409
      %p415 = scmp.eq.s32.totalorder %s29, 0
      %p416 = por %p414, %p415
      %p417 = scmp.ne.s32.totalorder %s406, %s409
      %p418 = scmp.eq.s32.totalorder %s34, 3
      %p419 = por %p417, %p418
      %p420 = scmp.ne.s32.totalorder %s409, %s410
      %p421 = scmp.eq.s32.totalorder %s34, 0
      %p422 = por %p420, %p421
      %p423 = scmp.ne.s32.totalorder %s409, %s410
      %p424 = scmp.eq.s32.totalorder %s35, 3
      %p425 = por %p423, %p424
      %p427 = scmp.ne.s32.totalorder %s410, %s426
      %p428 = scmp.eq.s32.totalorder %s35, 0
      %p429 = por %p427, %p428
      %s430 = ssub.s32 %s37, %s44
      %p431 = scmp.eq.s32.totalorder %s430, 0
      %s433 = sadd.s32 %s432, 1
      %s434 = scalar_select %p431, %s432, %s433
      %p437 = pneg %p431
      %p438 = scmp.eq.s32.totalorder %s29, 3
      %p439 = por %p437, %p438
      %p440 = scmp.ne.s32.totalorder %s432, %s435
      %p441 = scmp.eq.s32.totalorder %s29, 0
      %p442 = por %p440, %p441
      %p443 = scmp.ne.s32.totalorder %s432, %s435
      %p444 = scmp.eq.s32.totalorder %s34, 3
      %p445 = por %p443, %p444
      %p446 = scmp.ne.s32.totalorder %s435, %s436
      %p447 = scmp.eq.s32.totalorder %s34, 0
      %p448 = por %p446, %p447
      %p449 = scmp.ne.s32.totalorder %s435, %s436
      %p450 = scmp.eq.s32.totalorder %s35, 3
      %p451 = por %p449, %p450
      %p453 = scmp.ne.s32.totalorder %s436, %s452
      %p454 = scmp.eq.s32.totalorder %s35, 0
      %p455 = por %p453, %p454
      %s456 = ssub.s32 %s37, %s44
      %p457 = scmp.eq.s32.totalorder %s456, 0
      %s459 = sadd.s32 %s458, 1
      %s460 = scalar_select %p457, %s458, %s459
      %p463 = pneg %p457
      %p464 = scmp.eq.s32.totalorder %s29, 3
      %p465 = por %p463, %p464
      %p466 = scmp.ne.s32.totalorder %s458, %s461
      %p467 = scmp.eq.s32.totalorder %s29, 0
      %p468 = por %p466, %p467
      %p469 = scmp.ne.s32.totalorder %s458, %s461
      %p470 = scmp.eq.s32.totalorder %s34, 3
      %p471 = por %p469, %p470
      %p472 = scmp.ne.s32.totalorder %s461, %s462
      %p473 = scmp.eq.s32.totalorder %s34, 0
      %p474 = por %p472, %p473
      %p475 = scmp.ne.s32.totalorder %s461, %s462
      %p476 = scmp.eq.s32.totalorder %s35, 3
      %p477 = por %p475, %p476
      %p479 = scmp.ne.s32.totalorder %s462, %s478
      %p480 = scmp.eq.s32.totalorder %s35, 0
      %p481 = por %p479, %p480
      %s482 = ssub.s32 %s37, %s44
      %p483 = scmp.eq.s32.totalorder %s482, 0
      %s485 = sadd.s32 %s484, 1
      %s486 = scalar_select %p483, %s484, %s485
      %p489 = pneg %p483
      %p490 = scmp.eq.s32.totalorder %s29, 3
      %p491 = por %p489, %p490
      %p492 = scmp.ne.s32.totalorder %s484, %s487
      %p493 = scmp.eq.s32.totalorder %s29, 0
      %p494 = por %p492, %p493
      %p495 = scmp.ne.s32.totalorder %s484, %s487
      %p496 = scmp.eq.s32.totalorder %s34, 3
      %p497 = por %p495, %p496
      %p498 = scmp.ne.s32.totalorder %s487, %s488
      %p499 = scmp.eq.s32.totalorder %s34, 0
      %p500 = por %p498, %p499
      %p501 = scmp.ne.s32.totalorder %s487, %s488
      %p502 = scmp.eq.s32.totalorder %s35, 3
      %p503 = por %p501, %p502
      %p505 = scmp.ne.s32.totalorder %s488, %s504
      %p506 = scmp.eq.s32.totalorder %s35, 0
      %p507 = por %p505, %p506
      %s508 = ssub.s32 %s37, %s44
      %p509 = scmp.eq.s32.totalorder %s508, 0
      %s511 = sadd.s32 %s510, 1
      %s512 = scalar_select %p509, %s510, %s511
      %p515 = pneg %p509
      %p516 = scmp.eq.s32.totalorder %s29, 3
      %p517 = por %p515, %p516
      %p518 = scmp.ne.s32.totalorder %s510, %s513
      %p519 = scmp.eq.s32.totalorder %s29, 0
      %p520 = por %p518, %p519
      %p521 = scmp.ne.s32.totalorder %s510, %s513
      %p522 = scmp.eq.s32.totalorder %s34, 3
      %p523 = por %p521, %p522
      %p524 = scmp.ne.s32.totalorder %s513, %s514
      %p525 = scmp.eq.s32.totalorder %s34, 0
      %p526 = por %p524, %p525
      %p527 = scmp.ne.s32.totalorder %s513, %s514
      %p528 = scmp.eq.s32.totalorder %s35, 3
      %p529 = por %p527, %p528
      %p531 = scmp.ne.s32.totalorder %s514, %s530
      %p532 = scmp.eq.s32.totalorder %s35, 0
      %p533 = por %p531, %p532
      %s534 = ssub.s32 %s36, %s48
      %p535 = scmp.eq.s32.totalorder %s534, 0
      %s537 = sadd.s32 %s536, 1
      %s538 = scalar_select %p535, %s536, %s537
      %p541 = pneg %p535
      %p542 = scmp.eq.s32.totalorder %s29, 3
      %p543 = por %p541, %p542
      %p544 = scmp.ne.s32.totalorder %s536, %s539
      %p545 = scmp.eq.s32.totalorder %s29, 0
      %p546 = por %p544, %p545
      %p547 = scmp.ne.s32.totalorder %s536, %s539
      %p548 = scmp.eq.s32.totalorder %s34, 3
      %p549 = por %p547, %p548
      %p550 = scmp.ne.s32.totalorder %s539, %s540
      %p551 = scmp.eq.s32.totalorder %s34, 0
      %p552 = por %p550, %p551
      %p553 = scmp.ne.s32.totalorder %s539, %s540
      %p554 = scmp.eq.s32.totalorder %s35, 3
      %p555 = por %p553, %p554
      %p557 = scmp.ne.s32.totalorder %s540, %s556
      %p558 = scmp.eq.s32.totalorder %s35, 0
      %p559 = por %p557, %p558
      %p560 = scmp.le.s32.totalorder 1, %s29
      %p561 = scmp.lt.s32.totalorder %s29, 5
      %p562 = pnand %p560, %p561
      %p563 = pneg %p562
      // Predicated region
      $region9: #{image_encoder_forward.1} parent=5 // pred_check
        _
      $region10: #{image_encoder_forward.1} parent=5 // pred_check_branch
        %565 = sbr.rel (%p562) target = $region12
      $region11: #{image_encoder_forward.1} parent=5 // pred_region
        %s566 = ssub.s32 %s29, 1
        // Predicated region
        $region13: #{image_encoder_forward.1} parent=11 // pred_check
          %p567 = pneg %p88
        $region14: #{image_encoder_forward.1} parent=11 // pred_check_branch
          %569 = sbr.rel (%p567) target = $region16
        $region15: #{image_encoder_forward.1} parent=11 // pred_region
          _
        $region16: #{image_encoder_forward.1} parent=11 // pred_fallthru
          _
        // Predicated region
        $region17: #{image_encoder_forward.1} parent=11 // pred_check
          %p570 = pneg %p109
        $region18: #{image_encoder_forward.1} parent=11 // pred_check_branch
          %572 = sbr.rel (%p570) target = $region20
        $region19: #{image_encoder_forward.1} parent=11 // pred_region
          _
        $region20: #{image_encoder_forward.1} parent=11 // pred_fallthru
          _
        // Predicated region
        $region21: #{image_encoder_forward.1} parent=11 // pred_check
          %p573 = pneg %p130
        $region22: #{image_encoder_forward.1} parent=11 // pred_check_branch
          %575 = sbr.rel (%p573) target = $region24
        $region23: #{image_encoder_forward.1} parent=11 // pred_region
          _
        $region24: #{image_encoder_forward.1} parent=11 // pred_fallthru
          _
        // Predicated region
        $region25: #{image_encoder_forward.1} parent=11 // pred_check
          %p576 = pneg %p151
        $region26: #{image_encoder_forward.1} parent=11 // pred_check_branch
          %578 = sbr.rel (%p576) target = $region28
        $region27: #{image_encoder_forward.1} parent=11 // pred_region
          _
        $region28: #{image_encoder_forward.1} parent=11 // pred_fallthru
          _
        // Predicated region
        $region29: #{image_encoder_forward.1} parent=11 // pred_check
          %p579 = pneg %p172
        $region30: #{image_encoder_forward.1} parent=11 // pred_check_branch
          %581 = sbr.rel (%p579) target = $region32
        $region31: #{image_encoder_forward.1} parent=11 // pred_region
          _
        $region32: #{image_encoder_forward.1} parent=11 // pred_fallthru
          _
        // Predicated region
        $region33: #{image_encoder_forward.1} parent=11 // pred_check
          %p582 = pneg %p193
        $region34: #{image_encoder_forward.1} parent=11 // pred_check_branch
          %584 = sbr.rel (%p582) target = $region36
        $region35: #{image_encoder_forward.1} parent=11 // pred_region
          _
        $region36: #{image_encoder_forward.1} parent=11 // pred_fallthru
          _
        // Predicated region
        $region37: #{image_encoder_forward.1} parent=11 // pred_check
          %p585 = pneg %p214
        $region38: #{image_encoder_forward.1} parent=11 // pred_check_branch
          %587 = sbr.rel (%p585) target = $region40
        $region39: #{image_encoder_forward.1} parent=11 // pred_region
          _
        $region40: #{image_encoder_forward.1} parent=11 // pred_fallthru
          _
      $region12: #{image_encoder_forward.1} parent=5 // pred_fallthru
        _
      %p588 = scmp.lt.s32.totalorder %s29, 4
      // Predicated region
      $region41: #{image_encoder_forward.1} parent=5 // pred_check
        %p589 = pneg %p588
      $region42: #{image_encoder_forward.1} parent=5 // pred_check_branch
        %591 = sbr.rel (%p589) target = $region44
      $region43: #{image_encoder_forward.1} parent=5 // pred_region
        // Predicated region
        $region45: #{image_encoder_forward.1} parent=43 // pred_check
          %p592 = pneg %p61
        $region46: #{image_encoder_forward.1} parent=43 // pred_check_branch
          %594 = sbr.rel (%p592) target = $region48
        $region47: #{image_encoder_forward.1} parent=43 // pred_region
          %p595 = scmp.lt.s32.totalorder %s36, 1
          %s596 = scalar_select %p595, %s36, 1
          %s597 = smul.addr %s596, 2
          %s598 = smul.addr %s597, 2
          %s599 = scalar_lea.vmem %s0, %s598
        $region48: #{image_encoder_forward.1} parent=43 // pred_fallthru
          _
        // Predicated region
        $region49: #{image_encoder_forward.1} parent=43 // pred_check
          %p600 = pneg %p234
        $region50: #{image_encoder_forward.1} parent=43 // pred_check_branch
          %602 = sbr.rel (%p600) target = $region52
        $region51: #{image_encoder_forward.1} parent=43 // pred_region
          %p603 = scmp.lt.s32.totalorder %s37, 1
          %s604 = scalar_select %p603, %s37, 1
          %s605 = scalar_lea.vmem %s8, %s604
        $region52: #{image_encoder_forward.1} parent=43 // pred_fallthru
          _
        // Predicated region
        $region53: #{image_encoder_forward.1} parent=43 // pred_check
          %p606 = pneg %p260
        $region54: #{image_encoder_forward.1} parent=43 // pred_check_branch
          %608 = sbr.rel (%p606) target = $region56
        $region55: #{image_encoder_forward.1} parent=43 // pred_region
          %p609 = scmp.lt.s32.totalorder %s37, 1
          %s610 = scalar_select %p609, %s37, 1
          %s611 = scalar_lea.vmem %s9, %s610
        $region56: #{image_encoder_forward.1} parent=43 // pred_fallthru
          _
        // Predicated region
        $region57: #{image_encoder_forward.1} parent=43 // pred_check
          %p612 = pneg %p286
        $region58: #{image_encoder_forward.1} parent=43 // pred_check_branch
          %614 = sbr.rel (%p612) target = $region60
        $region59: #{image_encoder_forward.1} parent=43 // pred_region
          %p615 = scmp.lt.s32.totalorder %s37, 1
          %s616 = scalar_select %p615, %s37, 1
          %s617 = scalar_lea.vmem %s10, %s616
        $region60: #{image_encoder_forward.1} parent=43 // pred_fallthru
          _
        // Predicated region
        $region61: #{image_encoder_forward.1} parent=43 // pred_check
          %p618 = pneg %p312
        $region62: #{image_encoder_forward.1} parent=43 // pred_check_branch
          %620 = sbr.rel (%p618) target = $region64
        $region63: #{image_encoder_forward.1} parent=43 // pred_region
          %p621 = scmp.lt.s32.totalorder %s37, 1
          %s622 = scalar_select %p621, %s37, 1
          %s623 = scalar_lea.vmem %s11, %s622
        $region64: #{image_encoder_forward.1} parent=43 // pred_fallthru
          _
        // Predicated region
        $region65: #{image_encoder_forward.1} parent=43 // pred_check
          %p624 = pneg %p338
        $region66: #{image_encoder_forward.1} parent=43 // pred_check_branch
          %626 = sbr.rel (%p624) target = $region68
        $region67: #{image_encoder_forward.1} parent=43 // pred_region
          %p627 = scmp.lt.s32.totalorder %s37, 1
          %s628 = scalar_select %p627, %s37, 1
          %s629 = smul.addr %s628, 4
          %s630 = smul.addr %s629, 4
          %s631 = scalar_lea.vmem %s12, %s630
        $region68: #{image_encoder_forward.1} parent=43 // pred_fallthru
          _
        // Predicated region
        $region69: #{image_encoder_forward.1} parent=43 // pred_check
          %p632 = pneg %p364
        $region70: #{image_encoder_forward.1} parent=43 // pred_check_branch
          %634 = sbr.rel (%p632) target = $region72
        $region71: #{image_encoder_forward.1} parent=43 // pred_region
          %p635 = scmp.lt.s32.totalorder %s37, 1
          %s636 = scalar_select %p635, %s37, 1
          %s637 = scalar_lea.vmem %s13, %s636
        $region72: #{image_encoder_forward.1} parent=43 // pred_fallthru
          _
        // Predicated region
        $region73: #{image_encoder_forward.1} parent=43 // pred_check
          %p638 = pneg %p390
        $region74: #{image_encoder_forward.1} parent=43 // pred_check_branch
          %640 = sbr.rel (%p638) target = $region76
        $region75: #{image_encoder_forward.1} parent=43 // pred_region
          %p641 = scmp.lt.s32.totalorder %s37, 1
          %s642 = scalar_select %p641, %s37, 1
          %s643 = smul.addr %s642, 4
          %s644 = smul.addr %s643, 4
          %s645 = scalar_lea.vmem %s14, %s644
        $region76: #{image_encoder_forward.1} parent=43 // pred_fallthru
          _
        // Predicated region
        $region77: #{image_encoder_forward.1} parent=43 // pred_check
          %p646 = pneg %p416
        $region78: #{image_encoder_forward.1} parent=43 // pred_check_branch
          %648 = sbr.rel (%p646) target = $region80
        $region79: #{image_encoder_forward.1} parent=43 // pred_region
          %p649 = scmp.lt.s32.totalorder %s37, 1
          %s650 = scalar_select %p649, %s37, 1
          %s651 = scalar_lea.vmem %s15, %s650
        $region80: #{image_encoder_forward.1} parent=43 // pred_fallthru
          _
        // Predicated region
        $region81: #{image_encoder_forward.1} parent=43 // pred_check
          %p652 = pneg %p442
        $region82: #{image_encoder_forward.1} parent=43 // pred_check_branch
          %654 = sbr.rel (%p652) target = $region84
        $region83: #{image_encoder_forward.1} parent=43 // pred_region
          %p655 = scmp.lt.s32.totalorder %s37, 1
          %s656 = scalar_select %p655, %s37, 1
          %s657 = smul.addr %s656, 4
          %s658 = smul.addr %s657, 4
          %s659 = scalar_lea.vmem %s16, %s658
        $region84: #{image_encoder_forward.1} parent=43 // pred_fallthru
          _
        // Predicated region
        $region85: #{image_encoder_forward.1} parent=43 // pred_check
          %p660 = pneg %p468
        $region86: #{image_encoder_forward.1} parent=43 // pred_check_branch
          %662 = sbr.rel (%p660) target = $region88
        $region87: #{image_encoder_forward.1} parent=43 // pred_region
          %p663 = scmp.lt.s32.totalorder %s37, 1
          %s664 = scalar_select %p663, %s37, 1
          %s665 = scalar_lea.vmem %s17, %s664
        $region88: #{image_encoder_forward.1} parent=43 // pred_fallthru
          _
        // Predicated region
        $region89: #{image_encoder_forward.1} parent=43 // pred_check
          %p666 = pneg %p494
        $region90: #{image_encoder_forward.1} parent=43 // pred_check_branch
          %668 = sbr.rel (%p666) target = $region92
        $region91: #{image_encoder_forward.1} parent=43 // pred_region
          %p669 = scmp.lt.s32.totalorder %s37, 1
          %s670 = scalar_select %p669, %s37, 1
          %s671 = smul.addr %s670, 16
          %s672 = smul.addr %s671, 4
          %s673 = scalar_lea.vmem %s18, %s672
        $region92: #{image_encoder_forward.1} parent=43 // pred_fallthru
          _
        // Predicated region
        $region93: #{image_encoder_forward.1} parent=43 // pred_check
          %p674 = pneg %p520
        $region94: #{image_encoder_forward.1} parent=43 // pred_check_branch
          %676 = sbr.rel (%p674) target = $region96
        $region95: #{image_encoder_forward.1} parent=43 // pred_region
          %p677 = scmp.lt.s32.totalorder %s37, 1
          %s678 = scalar_select %p677, %s37, 1
          %s679 = scalar_lea.vmem %s19, %s678
        $region96: #{image_encoder_forward.1} parent=43 // pred_fallthru
          _
      $region44: #{image_encoder_forward.1} parent=5 // pred_fallthru
        _
      %p680 = scmp.le.s32.totalorder 1, %s29
      %p681 = scmp.lt.s32.totalorder %s29, 5
      %p682 = pnand %p680, %p681
      %p683 = pneg %p682
      // Predicated region
      $region97: #{image_encoder_forward.1} parent=5 // pred_check
        _
      $region98: #{image_encoder_forward.1} parent=5 // pred_check_branch
        %685 = sbr.rel (%p682) target = $region100
      $region99: #{image_encoder_forward.1} parent=5 // pred_region
        %s686 = ssub.s32 %s29, 1
        %p687 = scmp.lt.s32.totalorder %s38, 1
        %s688 = scalar_select %p687, %s38, 1
        %s689 = smul.addr %s688, 2
        %s690 = smul.addr %s689, 2
        %s691 = scalar_lea.vmem %s0, %s690
        %p692 = pneg %p67
        %p693 = pneg %p64
        %p694 = pneg %p88
        %p695 = pneg %p85
        %p696 = pneg %p109
        %p697 = pneg %p106
        %p698 = pneg %p130
        %p699 = pneg %p127
        %p700 = pneg %p151
        %p701 = pneg %p148
        %p702 = pneg %p172
        %p703 = pneg %p169
        %p704 = pneg %p193
        %p705 = pneg %p190
        %p706 = pneg %p214
        %p707 = pneg %p211
        %p708 = scmp.lt.s32.totalorder %s39, 1
        %s709 = scalar_select %p708, %s39, 1
        %s710 = scalar_lea.vmem %s8, %s709
        %p711 = pneg %p240
        %p712 = pneg %p237
        %p713 = scmp.lt.s32.totalorder %s39, 1
        %s714 = scalar_select %p713, %s39, 1
        %s715 = scalar_lea.vmem %s9, %s714
        %p716 = pneg %p266
        %p717 = pneg %p263
        %p718 = scmp.lt.s32.totalorder %s39, 1
        %s719 = scalar_select %p718, %s39, 1
        %s720 = scalar_lea.vmem %s10, %s719
        %p721 = pneg %p292
        %p722 = pneg %p289
        %p723 = scmp.lt.s32.totalorder %s39, 1
        %s724 = scalar_select %p723, %s39, 1
        %s725 = scalar_lea.vmem %s11, %s724
        %p726 = pneg %p318
        %p727 = pneg %p315
        %p728 = scmp.lt.s32.totalorder %s39, 1
        %s729 = scalar_select %p728, %s39, 1
        %s730 = smul.addr %s729, 4
        %s731 = smul.addr %s730, 4
        %s732 = scalar_lea.vmem %s12, %s731
        %p733 = pneg %p344
        %p734 = pneg %p341
        %p735 = scmp.lt.s32.totalorder %s39, 1
        %s736 = scalar_select %p735, %s39, 1
        %s737 = scalar_lea.vmem %s13, %s736
        %p738 = pneg %p370
        %p739 = pneg %p367
        %p740 = scmp.lt.s32.totalorder %s39, 1
        %s741 = scalar_select %p740, %s39, 1
        %s742 = smul.addr %s741, 4
        %s743 = smul.addr %s742, 4
        %s744 = scalar_lea.vmem %s14, %s743
        %p745 = pneg %p396
        %p746 = pneg %p393
        %p747 = scmp.lt.s32.totalorder %s39, 1
        %s748 = scalar_select %p747, %s39, 1
        %s749 = scalar_lea.vmem %s15, %s748
        %p750 = pneg %p422
        %p751 = pneg %p419
        %p752 = scmp.lt.s32.totalorder %s39, 1
        %s753 = scalar_select %p752, %s39, 1
        %s754 = smul.addr %s753, 4
        %s755 = smul.addr %s754, 4
        %s756 = scalar_lea.vmem %s16, %s755
        %p757 = pneg %p448
        %p758 = pneg %p445
        %p759 = scmp.lt.s32.totalorder %s39, 1
        %s760 = scalar_select %p759, %s39, 1
        %s761 = scalar_lea.vmem %s17, %s760
        %p762 = pneg %p474
        %p763 = pneg %p471
        %p764 = scmp.lt.s32.totalorder %s39, 1
        %s765 = scalar_select %p764, %s39, 1
        %s766 = smul.addr %s765, 16
        %s767 = smul.addr %s766, 4
        %s768 = scalar_lea.vmem %s18, %s767
        %p769 = pneg %p500
        %p770 = pneg %p497
        %p771 = scmp.lt.s32.totalorder %s39, 1
        %s772 = scalar_select %p771, %s39, 1
        %s773 = scalar_lea.vmem %s19, %s772
        %p774 = pneg %p526
        %p775 = pneg %p523
        %p776 = pneg %p552
        %p777 = pneg %p549
        %s778 = sand.u32 %s539, 1
        %s779 = scalar_lea.sflag [#allocation4], %s778
        %s780 = sand.u32 %s539, 1
        %s781 = smul.addr %s780, 4
        %s782 = scalar_lea.vmem [#allocation3], %s781
        %p783 = scmp.lt.s32.totalorder %s38, 1
        %s784 = scalar_select %p783, %s38, 1
        %s785 = smul.addr %s784, 2
        %s786 = smul.addr %s785, 2
        %s787 = scalar_lea.vmem %s0, %s786
        %p788 = scmp.lt.s32.totalorder %s39, 1
        %s789 = scalar_select %p788, %s39, 1
        %s790 = scalar_lea.vmem %s8, %s789
        %p791 = scmp.lt.s32.totalorder %s39, 1
        %s792 = scalar_select %p791, %s39, 1
        %s793 = scalar_lea.vmem %s9, %s792
        %p794 = scmp.lt.s32.totalorder %s39, 1
        %s795 = scalar_select %p794, %s39, 1
        %s796 = scalar_lea.vmem %s10, %s795
        %p797 = scmp.lt.s32.totalorder %s39, 1
        %s798 = scalar_select %p797, %s39, 1
        %s799 = scalar_lea.vmem %s11, %s798
        %p800 = scmp.lt.s32.totalorder %s39, 1
        %s801 = scalar_select %p800, %s39, 1
        %s802 = smul.addr %s801, 4
        %s803 = smul.addr %s802, 4
        %s804 = scalar_lea.vmem %s12, %s803
        %p805 = scmp.lt.s32.totalorder %s39, 1
        %s806 = scalar_select %p805, %s39, 1
        %s807 = scalar_lea.vmem %s13, %s806
        %p808 = scmp.lt.s32.totalorder %s39, 1
        %s809 = scalar_select %p808, %s39, 1
        %s810 = smul.addr %s809, 4
        %s811 = smul.addr %s810, 4
        %s812 = scalar_lea.vmem %s14, %s811
        %p813 = scmp.lt.s32.totalorder %s39, 1
        %s814 = scalar_select %p813, %s39, 1
        %s815 = scalar_lea.vmem %s15, %s814
        %p816 = scmp.lt.s32.totalorder %s39, 1
        %s817 = scalar_select %p816, %s39, 1
        %s818 = smul.addr %s817, 4
        %s819 = smul.addr %s818, 4
        %s820 = scalar_lea.vmem %s16, %s819
        %p821 = scmp.lt.s32.totalorder %s39, 1
        %s822 = scalar_select %p821, %s39, 1
        %s823 = scalar_lea.vmem %s17, %s822
        %p824 = scmp.lt.s32.totalorder %s39, 1
        %s825 = scalar_select %p824, %s39, 1
        %s826 = smul.addr %s825, 16
        %s827 = smul.addr %s826, 4
        %s828 = scalar_lea.vmem %s18, %s827
        %p829 = scmp.lt.s32.totalorder %s39, 1
        %s830 = scalar_select %p829, %s39, 1
        %s831 = scalar_lea.vmem %s19, %s830
        %p833 = scmp.eq.s32.totalorder %s39, 0
        // Predicated region
        $region101: #{image_encoder_forward.1} parent=99 // pred_check
          %p834 = pneg %p833
        $region102: #{image_encoder_forward.1} parent=99 // pred_check_branch
          %836 = sbr.rel (%p834) target = $region104
        $region103: #{image_encoder_forward.1} parent=99 // pred_region
          %v837 = vld [vmem:[%s787] sm:$0xf]
          %v838 = vld [vmem:[%s1] sm:$0xf]
          %v839 = vld [vmem:[%s1 + $0x4] sm:$0xf]
          %v840 = vld [vmem:[%s1 + $0x8] sm:$0xf]
          %v841 = vld [vmem:[%s1 + $0xc] sm:$0xf]
          %v842 = vld [vmem:[%s1 + $0x10] sm:$0xf]
          %v843 = vld [vmem:[%s1 + $0x14] sm:$0xf]
          %v844 = vld [vmem:[%s1 + $0x18] sm:$0xf]
          %v845 = vld [vmem:[%s1 + $0x1c] sm:$0xf]
          %v846 = vld [vmem:[%s1 + $0x20] sm:$0xf]
          %v847 = vld [vmem:[%s1 + $0x24] sm:$0xf]
          %v848 = vld [vmem:[%s1 + $0x28] sm:$0xf]
          %v849 = vld [vmem:[%s1 + $0x2c] sm:$0xf]
          %v850 = vld [vmem:[%s1 + $0x30] sm:$0xf]
          %v851 = vld [vmem:[%s1 + $0x34] sm:$0xf]
          %v852 = vld [vmem:[%s1 + $0x38] sm:$0xf]
          %v853 = vld [vmem:[%s1 + $0x3c] sm:$0xf]
          %v854 = vld [vmem:[%s1 + $0x40] sm:$0xf]
          %v855 = vld [vmem:[%s1 + $0x44] sm:$0xf]
          %v856 = vld [vmem:[%s1 + $0x48] sm:$0xf]
          %v857 = vld [vmem:[%s1 + $0x4c] sm:$0xf]
          %v858 = vld [vmem:[%s1 + $0x50] sm:$0xf]
          %v859 = vld [vmem:[%s1 + $0x54] sm:$0xf]
          %v860 = vld [vmem:[%s1 + $0x58] sm:$0xf]
          %v861 = vld [vmem:[%s1 + $0x5c] sm:$0xf]
          %v862 = vld [vmem:[%s3] sm:$0x1f]
          %v863 = vld [vmem:[%s2] sm:$0x1]
          %v864 = vadd.f32 %v863, %v862
          %866 = vst [vmem:[#allocation1] ss:$4 sm:$0xff] %v837
          %v867 = vld.sshfl [vmem:[#allocation1] sm:$0xff pattern:$0x73625140]
          %v868 = vld.sshfl [vmem:[#allocation1 + $0x8] sm:$0xff pattern:$0x73625140]
          %v894 = vunpack.c.l.b16 %v838
          %v895 = vunpack.c.l.b16 %v839
          %v896 = vunpack.c.l.b16 %v840
          %v897 = vunpack.c.l.b16 %v841
          %v898 = vunpack.c.l.b16 %v842
          %v899 = vunpack.c.l.b16 %v843
          %v900 = vunpack.c.l.b16 %v844
          %v901 = vunpack.c.l.b16 %v845
          %v902 = vunpack.c.l.b16 %v846
          %v903 = vunpack.c.l.b16 %v847
          %v904 = vunpack.c.l.b16 %v848
          %v905 = vunpack.c.l.b16 %v849
          %v906 = vunpack.c.l.b16 %v850
          %v907 = vunpack.c.l.b16 %v851
          %v908 = vunpack.c.l.b16 %v852
          %v909 = vunpack.c.l.b16 %v853
          %v910 = vunpack.c.l.b16 %v854
          %v911 = vunpack.c.l.b16 %v855
          %v912 = vunpack.c.l.b16 %v856
          %v913 = vunpack.c.l.b16 %v857
          %v914 = vunpack.c.l.b16 %v858
          %v915 = vunpack.c.l.b16 %v859
          %v916 = vunpack.c.l.b16 %v860
          %v917 = vunpack.c.l.b16 %v861
          %v918 = vpack.c.b16 %v895, %v894
          %v919 = vpack.c.b16 %v897, %v896
          %v920 = vpack.c.b16 %v899, %v898
          %v921 = vpack.c.b16 %v901, %v900
          %v922 = vpack.c.b16 %v903, %v902
          %v923 = vpack.c.b16 %v905, %v904
          %v924 = vpack.c.b16 %v907, %v906
          %v925 = vpack.c.b16 %v909, %v908
          %v926 = vpack.c.b16 %v911, %v910
          %v927 = vpack.c.b16 %v913, %v912
          %v928 = vpack.c.b16 %v915, %v914
          %v929 = vpack.c.b16 %v917, %v916
          %v943 = vrot.slane %v862, 1
          %vm945 = vcmask 523264
          %v946 = vsel %vm945, %v868, 0
          %948 = vmatpush.bf16.msra.mxu0 %v925
          %949 = vmatpush.bf16.msra.mxu0 %v924
          %950 = vmatpush.bf16.msra.mxu0 %v923
          %951 = vmatpush.bf16.msra.mxu0 %v922
          %952 = vmatpush.bf16.msra.mxu0 %v921
          %953 = vmatpush.bf16.msra.mxu0 %v920
          %954 = vmatpush.bf16.msra.mxu0 %v919
          %955 = vmatpush.bf16.msra.mxu0 %v918
          %956 = vmatmul.bf16.gmra.mxu0 %v867
          %v957 = vpop.f32.mrf.mxu0
          %v958 = vadd.f32 %v943, %v957
          %v959 = vpop.f32.mrf.mxu0
          %960 = vdwg.mxu0
          %961 = vmatpush.bf16.msra.mxu0 0
          %962 = vmatpush.bf16.msra.mxu0 0
          %963 = vmatpush.bf16.msra.mxu0 0
          %964 = vmatpush.bf16.msra.mxu0 0
          %965 = vmatpush.bf16.msra.mxu0 %v929
          %966 = vmatpush.bf16.msra.mxu0 %v928
          %967 = vmatpush.bf16.msra.mxu0 %v927
          %968 = vmatpush.bf16.msra.mxu0 %v926
          %969 = vmatmul.bf16.gmra.mxu0 %v946
          %v970 = vpop.f32.mrf.mxu0
          %v971 = vadd.f32 %v958, %v970
          %v972 = vpop.f32.mrf.mxu0
          %973 = vdwg.mxu0
          %v974 = vld [vmem:[%s4] sm:$0x1]
          %v975 = vld [vmem:[%s5] sm:$0x1]
          %vm976 = vcmask 253952
          %v977 = vsel %vm976, %v864, 0.0
          %978 = vadd.xlane.f32.xlu0 %v977
          %v979 = vpop.xlane.xlu0 %978
          %v980 = vrcp.pop 32.0
          %v981 = vmul.f32 32.0, %v980
          %v982 = vsub.f32 1.0, %v981
          %v983 = vmul.f32 %v980, %v982
          %v984 = vadd.f32 %v980, %v983
          %vm985 = vweird.f32 %v980
          %v986 = vsel %vm985, %v980, %v984
          %v987 = vmul.f32 %v979, %v986
          %v988 = vsub.f32 %v864, %v987
          %v989 = vmul.f32 %v988, %v988
          %v990 = vsel %vm976, %v989, 0.0
          %991 = vadd.xlane.f32.xlu0 %v990
          %v992 = vpop.xlane.xlu0 %991
          %v993 = vmul.f32 %v992, %v986
          %v994 = vadd.f32 %v993, 1e-05
          %v995 = vrsqrt.pop %v994
          %v996 = vmul.f32 %v995, %v994
          %v997 = vmul.f32 %v996, %v995
          %v998 = vmul.f32 0.5, %v997
          %v999 = vsub.f32 1.5, %v998
          %v1000 = vmul.f32 %v995, %v999
          %vm1001 = vweird.f32 %v994
          %vm1002 = vweird.f32 %v995
          %vm1003 = vmor %vm1001, %vm1002
          %v1004 = vsel %vm1003, %v995, %v1000
          %v1005 = vmul.f32 %v988, %v1004
          %v1006 = vmul.f32 %v1005, %v974
          %v1007 = vadd.f32 %v1006, %v975
          %1008 = vst.msk [vmem:[#allocation2] sm:$0x1] %vm976, %v1007
          %vm1009 = vcmask 257024
          %v1010 = vsel %vm1009, %v971, 0.0
          %1011 = vadd.xlane.f32.xlu0 %v1010
          %v1012 = vpop.xlane.xlu0 %1011
          %v1013 = vmul.f32 %v1012, %v986
          %v1014 = vsub.f32 %v971, %v1013
          %v1015 = vmul.f32 %v1014, %v1014
          %v1016 = vsel %vm1009, %v1015, 0.0
          %1017 = vadd.xlane.f32.xlu0 %v1016
          %v1018 = vpop.xlane.xlu0 %1017
          %v1019 = vmul.f32 %v1018, %v986
          %v1020 = vadd.f32 %v1019, 1e-05
          %v1021 = vrsqrt.pop %v1020
          %v1022 = vmul.f32 %v1021, %v1020
          %v1023 = vmul.f32 %v1022, %v1021
          %v1024 = vmul.f32 0.5, %v1023
          %v1025 = vsub.f32 1.5, %v1024
          %v1026 = vmul.f32 %v1021, %v1025
          %vm1027 = vweird.f32 %v1020
          %vm1028 = vweird.f32 %v1021
          %vm1029 = vmor %vm1027, %vm1028
          %v1030 = vsel %vm1029, %v1021, %v1026
          %v1031 = vmul.f32 %v1014, %v1030
          %v1033 = vperm.slane %v974, 0
          %v1035 = vmul.f32 %v1031, %v1033
          %v1037 = vperm.slane %v975, 0
          %v1039 = vadd.f32 %v1035, %v1037
          %1040 = vst.msk [vmem:[#allocation2 + $0x1] sm:$0xf] %vm1009, %v1039
        $region104: #{image_encoder_forward.1} parent=99 // pred_fallthru
          _
        %v1041 = vld [vmem:[#allocation2] sm:$0x1f]
        %v1042 = vld [vmem:[%s790] sm:$0x1]
        %v1043 = vld [vmem:[%s793] sm:$0x1]
        %vm1044 = vcmask 258048
        %v1045 = vsel %vm1044, %v1041, 0.0
        %1046 = vadd.xlane.f32.xlu0 %v1045
        %v1047 = vpop.xlane.xlu0 %1046
        %v1048 = vrcp.pop 32.0
        %v1049 = vmul.f32 32.0, %v1048
        %v1050 = vsub.f32 1.0, %v1049
        %v1051 = vmul.f32 %v1048, %v1050
        %v1052 = vadd.f32 %v1048, %v1051
        %vm1053 = vweird.f32 %v1048
        %v1054 = vsel %vm1053, %v1048, %v1052
        %v1055 = vmul.f32 %v1047, %v1054
        %v1056 = vsub.f32 %v1041, %v1055
        %v1057 = vmul.f32 %v1056, %v1056
        %v1058 = vsel %vm1044, %v1057, 0.0
        %1059 = vadd.xlane.f32.xlu0 %v1058
        %v1060 = vpop.xlane.xlu0 %1059
        %v1061 = vmul.f32 %v1060, %v1054
        %v1062 = vadd.f32 %v1061, 1e-05
        %v1063 = vrsqrt.pop %v1062
        %v1064 = vmul.f32 %v1063, %v1062
        %v1065 = vmul.f32 %v1064, %v1063
        %v1066 = vmul.f32 0.5, %v1065
        %v1067 = vsub.f32 1.5, %v1066
        %v1068 = vmul.f32 %v1063, %v1067
        %vm1069 = vweird.f32 %v1062
        %vm1070 = vweird.f32 %v1063
        %vm1071 = vmor %vm1069, %vm1070
        %v1072 = vsel %vm1071, %v1063, %v1068
        %v1073 = vmul.f32 %v1056, %v1072
        %v1075 = vperm.slane %v1042, 0
        %v1077 = vmul.f32 %v1073, %v1075
        %v1079 = vperm.slane %v1043, 0
        %v1081 = vadd.f32 %v1077, %v1079
        %v1082 = vpack.c.bf16 %v1081, %v1081
        %v1083 = vld [vmem:[%s804] sm:$0xf]
        %v1084 = vld [vmem:[%s804 + $0x4] sm:$0xf]
        %v1085 = vld [vmem:[%s804 + $0x8] sm:$0xf]
        %v1086 = vld [vmem:[%s804 + $0xc] sm:$0xf]
        %v1087 = vld [vmem:[%s807] sm:$0x1]
        %v1089 = vperm.slane %v1087, 0
        %v1095 = vunpack.c.l.b16 %v1083
        %v1096 = vunpack.c.l.b16 %v1084
        %v1097 = vunpack.c.l.b16 %v1085
        %v1098 = vunpack.c.l.b16 %v1086
        %v1099 = vpack.c.b16 %v1096, %v1095
        %v1100 = vpack.c.b16 %v1098, %v1097
        %vm1103 = vcmask 261120
        %v1105 = vsel %vm1103, %v1082, 0
        %1107 = vmatpush.bf16.msra.mxu0 0
        %1108 = vmatpush.bf16.msra.mxu0 0
        %1109 = vmatpush.bf16.msra.mxu0 0
        %1110 = vmatpush.bf16.msra.mxu0 0
        %1111 = vmatpush.bf16.msra.mxu0 0
        %1112 = vmatpush.bf16.msra.mxu0 0
        %1113 = vmatpush.bf16.msra.mxu0 %v1100
        %1114 = vmatpush.bf16.msra.mxu0 %v1099
        %1115 = vmatmul.bf16.gmra.mxu0 %v1105
        %v1116 = vpop.f32.mrf.mxu0
        %v1117 = vadd.f32 %v1089, %v1116
        %v1118 = vpop.f32.mrf.mxu0
        %1119 = vdwg.mxu0
        %v1120 = vld [vmem:[%s812] sm:$0xf]
        %v1121 = vld [vmem:[%s812 + $0x4] sm:$0xf]
        %v1122 = vld [vmem:[%s812 + $0x8] sm:$0xf]
        %v1123 = vld [vmem:[%s812 + $0xc] sm:$0xf]
        %v1124 = vpack.c.bf16 %v1117, %v1117
        %1126 = vrot.lane.b32.xlu0 %v1124, 96
        %v1127 = vpop.permute.xlu0 %1126
        %vm1128 = vcmask 64512
        %v1130 = vsel %vm1128, %v1124, 0
        %v1133 = vsel %vm1128, %v1127, 0
        %1135 = vmatpush.bf16.xpose.msra.mxu0 0
        %1136 = vmatpush.bf16.xpose.msra.mxu0 0
        %1137 = vmatpush.bf16.xpose.msra.mxu0 0
        %1138 = vmatpush.bf16.xpose.msra.mxu0 0
        %1139 = vmatpush.bf16.xpose.msra.mxu0 0
        %1140 = vmatpush.bf16.xpose.msra.mxu0 0
        %1141 = vmatpush.bf16.xpose.msra.mxu0 0
        %1142 = vmatpush.bf16.xpose.msra.mxu0 %v1133
        %1143 = vmatmul.bf16.gmra.mxu0 %v1130
        %v1144 = vpop.f32.mrf.mxu0
        %v1145 = vadd.f32 0.0, %v1144
        %v1146 = vpop.f32.mrf.mxu0
        %1147 = vdwg.mxu0
        %v1148 = vmul.f32 %v1145, 0.35355338
        %vm1149 = vcmask 36864
        %v1150 = vsel %vm1149, %v1148, -inf
        %1151 = vmax.xlane.f32.xlu0 %v1150
        %v1152 = vpop.xlane.xlu0 %1151
        %v1153 = vsub.f32 %v1148, %v1152
        %v1154 = vmul.f32 %v1153, 1.442695
        %v1155 = vpow.pop %v1154
        %v1156 = vsel %vm1149, %v1155, 0.0
        %1157 = vadd.xlane.f32.xlu0 %v1156
        %v1158 = vpop.xlane.xlu0 %1157
        %v1159 = vrcp.pop %v1158
        %v1160 = vmul.f32 %v1155, %v1159
        %v1161 = vpack.c.bf16 %v1160, %v1160
        %1162 = vrot.lane.b32.xlu0 %v1124, 64
        %v1163 = vpop.permute.xlu0 %1162
        %vm1164 = vcmask 39936
        %v1166 = vsel %vm1164, %v1161, 0
        %vm1168 = vcmask 1041408
        %vm1169 = vcmask 1042432
        %v1170 = vsel %vm1168, 4294967295, 65535
        %v1171 = vsel %vm1169, %v1170, 0
        %v1173 = vand.u32 %v1163, %v1171
        %1175 = vmatpush.bf16.msra.mxu0 0
        %1176 = vmatpush.bf16.msra.mxu0 0
        %1177 = vmatpush.bf16.msra.mxu0 0
        %1178 = vmatpush.bf16.msra.mxu0 0
        %1179 = vmatpush.bf16.msra.mxu0 0
        %1180 = vmatpush.bf16.msra.mxu0 0
        %1181 = vmatpush.bf16.msra.mxu0 0
        %1182 = vmatpush.bf16.msra.mxu0 %v1173
        %1183 = vmatmul.bf16.gmra.mxu0 %v1166
        %v1184 = vpop.f32.mrf.mxu0
        %v1185 = vadd.f32 0.0, %v1184
        %v1186 = vpop.f32.mrf.mxu0
        %1187 = vdwg.mxu0
        %v1188 = vpack.c.bf16 %v1185, %v1185
        %1189 = vrot.lane.b32.xlu0 %v1124, 120
        %v1190 = vpop.permute.xlu0 %1189
        %1191 = vrot.lane.b32.xlu0 %v1124, 88
        %v1192 = vpop.permute.xlu0 %1191
        %v1194 = vsel %vm1128, %v1190, 0
        %v1197 = vsel %vm1128, %v1192, 0
        %1199 = vmatpush.bf16.xpose.msra.mxu0 0
        %1200 = vmatpush.bf16.xpose.msra.mxu0 0
        %1201 = vmatpush.bf16.xpose.msra.mxu0 0
        %1202 = vmatpush.bf16.xpose.msra.mxu0 0
        %1203 = vmatpush.bf16.xpose.msra.mxu0 0
        %1204 = vmatpush.bf16.xpose.msra.mxu0 0
        %1205 = vmatpush.bf16.xpose.msra.mxu0 0
        %1206 = vmatpush.bf16.xpose.msra.mxu0 %v1197
        %1207 = vmatmul.bf16.gmra.mxu0 %v1194
        %v1208 = vpop.f32.mrf.mxu0
        %v1209 = vadd.f32 0.0, %v1208
        %v1210 = vpop.f32.mrf.mxu0
        %1211 = vdwg.mxu0
        %v1212 = vmul.f32 %v1209, 0.35355338
        %v1213 = vsel %vm1149, %v1212, -inf
        %1214 = vmax.xlane.f32.xlu0 %v1213
        %v1215 = vpop.xlane.xlu0 %1214
        %v1216 = vsub.f32 %v1212, %v1215
        %v1217 = vmul.f32 %v1216, 1.442695
        %v1218 = vpow.pop %v1217
        %v1219 = vsel %vm1149, %v1218, 0.0
        %1220 = vadd.xlane.f32.xlu0 %v1219
        %v1221 = vpop.xlane.xlu0 %1220
        %v1222 = vrcp.pop %v1221
        %v1223 = vmul.f32 %v1218, %v1222
        %v1224 = vpack.c.bf16 %v1223, %v1223
        %1225 = vrot.lane.b32.xlu0 %v1124, 56
        %v1226 = vpop.permute.xlu0 %1225
        %v1228 = vsel %vm1164, %v1224, 0
        %v1231 = vand.u32 %v1226, %v1171
        %1233 = vmatpush.bf16.msra.mxu0 0
        %1234 = vmatpush.bf16.msra.mxu0 0
        %1235 = vmatpush.bf16.msra.mxu0 0
        %1236 = vmatpush.bf16.msra.mxu0 0
        %1237 = vmatpush.bf16.msra.mxu0 0
        %1238 = vmatpush.bf16.msra.mxu0 0
        %1239 = vmatpush.bf16.msra.mxu0 0
        %1240 = vmatpush.bf16.msra.mxu0 %v1231
        %1241 = vmatmul.bf16.gmra.mxu0 %v1228
        %v1242 = vpop.f32.mrf.mxu0
        %v1243 = vadd.f32 0.0, %v1242
        %v1244 = vpop.f32.mrf.mxu0
        %1245 = vdwg.mxu0
        %v1246 = vpack.c.bf16 %v1243, %v1243
        %v1248 = vsel %vm1128, %v1246, 0
        %vm1250 = vcmask 1043456
        %v1252 = vsel %vm1250, %v1121, 0
        %1254 = vmatpush.bf16.msra.mxu0 0
        %1255 = vmatpush.bf16.msra.mxu0 0
        %1256 = vmatpush.bf16.msra.mxu0 0
        %1257 = vmatpush.bf16.msra.mxu0 0
        %1258 = vmatpush.bf16.msra.mxu0 0
        %1259 = vmatpush.bf16.msra.mxu0 0
        %1260 = vmatpush.bf16.msra.mxu0 0
        %1261 = vmatpush.bf16.msra.mxu0 %v1252
        %1262 = vmatmul.bf16.gmra.mxu0 %v1248
        %v1263 = vpop.f32.mrf.mxu0
        %v1264 = vadd.f32 0.0, %v1263
        %v1265 = vpop.f32.mrf.mxu0
        %1266 = vdwg.mxu0
        %v1268 = vsel %vm1128, %v1188, 0
        %v1271 = vsel %vm1250, %v1120, 0
        %1273 = vmatpush.bf16.msra.mxu0 0
        %1274 = vmatpush.bf16.msra.mxu0 0
        %1275 = vmatpush.bf16.msra.mxu0 0
        %1276 = vmatpush.bf16.msra.mxu0 0
        %1277 = vmatpush.bf16.msra.mxu0 0
        %1278 = vmatpush.bf16.msra.mxu0 0
        %1279 = vmatpush.bf16.msra.mxu0 0
        %1280 = vmatpush.bf16.msra.mxu0 %v1271
        %1281 = vmatmul.bf16.gmra.mxu0 %v1268
        %v1282 = vpop.f32.mrf.mxu0
        %v1283 = vadd.f32 %v1264, %v1282
        %v1284 = vpop.f32.mrf.mxu0
        %1285 = vdwg.mxu0
        %1286 = vrot.lane.b32.xlu0 %v1124, 112
        %v1287 = vpop.permute.xlu0 %1286
        %1288 = vrot.lane.b32.xlu0 %v1124, 80
        %v1289 = vpop.permute.xlu0 %1288
        %v1291 = vsel %vm1128, %v1287, 0
        %v1294 = vsel %vm1128, %v1289, 0
        %1296 = vmatpush.bf16.xpose.msra.mxu0 0
        %1297 = vmatpush.bf16.xpose.msra.mxu0 0
        %1298 = vmatpush.bf16.xpose.msra.mxu0 0
        %1299 = vmatpush.bf16.xpose.msra.mxu0 0
        %1300 = vmatpush.bf16.xpose.msra.mxu0 0
        %1301 = vmatpush.bf16.xpose.msra.mxu0 0
        %1302 = vmatpush.bf16.xpose.msra.mxu0 0
        %1303 = vmatpush.bf16.xpose.msra.mxu0 %v1294
        %1304 = vmatmul.bf16.gmra.mxu0 %v1291
        %v1305 = vpop.f32.mrf.mxu0
        %v1306 = vadd.f32 0.0, %v1305
        %v1307 = vpop.f32.mrf.mxu0
        %1308 = vdwg.mxu0
        %v1309 = vmul.f32 %v1306, 0.35355338
        %v1310 = vsel %vm1149, %v1309, -inf
        %1311 = vmax.xlane.f32.xlu0 %v1310
        %v1312 = vpop.xlane.xlu0 %1311
        %v1313 = vsub.f32 %v1309, %v1312
        %v1314 = vmul.f32 %v1313, 1.442695
        %v1315 = vpow.pop %v1314
        %v1316 = vsel %vm1149, %v1315, 0.0
        %1317 = vadd.xlane.f32.xlu0 %v1316
        %v1318 = vpop.xlane.xlu0 %1317
        %v1319 = vrcp.pop %v1318
        %v1320 = vmul.f32 %v1315, %v1319
        %v1321 = vpack.c.bf16 %v1320, %v1320
        %1322 = vrot.lane.b32.xlu0 %v1124, 48
        %v1323 = vpop.permute.xlu0 %1322
        %v1325 = vsel %vm1164, %v1321, 0
        %v1328 = vand.u32 %v1323, %v1171
        %1330 = vmatpush.bf16.msra.mxu0 0
        %1331 = vmatpush.bf16.msra.mxu0 0
        %1332 = vmatpush.bf16.msra.mxu0 0
        %1333 = vmatpush.bf16.msra.mxu0 0
        %1334 = vmatpush.bf16.msra.mxu0 0
        %1335 = vmatpush.bf16.msra.mxu0 0
        %1336 = vmatpush.bf16.msra.mxu0 0
        %1337 = vmatpush.bf16.msra.mxu0 %v1328
        %1338 = vmatmul.bf16.gmra.mxu0 %v1325
        %v1339 = vpop.f32.mrf.mxu0
        %v1340 = vadd.f32 0.0, %v1339
        %v1341 = vpop.f32.mrf.mxu0
        %1342 = vdwg.mxu0
        %v1343 = vpack.c.bf16 %v1340, %v1340
        %v1345 = vsel %vm1128, %v1343, 0
        %v1348 = vsel %vm1250, %v1122, 0
        %1350 = vmatpush.bf16.msra.mxu0 0
        %1351 = vmatpush.bf16.msra.mxu0 0
        %1352 = vmatpush.bf16.msra.mxu0 0
        %1353 = vmatpush.bf16.msra.mxu0 0
        %1354 = vmatpush.bf16.msra.mxu0 0
        %1355 = vmatpush.bf16.msra.mxu0 0
        %1356 = vmatpush.bf16.msra.mxu0 0
        %1357 = vmatpush.bf16.msra.mxu0 %v1348
        %1358 = vmatmul.bf16.gmra.mxu0 %v1345
        %v1359 = vpop.f32.mrf.mxu0
        %v1360 = vadd.f32 0.0, %v1359
        %v1361 = vpop.f32.mrf.mxu0
        %1362 = vdwg.mxu0
        %v1363 = vadd.f32 %v1283, %v1360
        %1364 = vrot.lane.b32.xlu0 %v1124, 104
        %v1365 = vpop.permute.xlu0 %1364
        %1366 = vrot.lane.b32.xlu0 %v1124, 72
        %v1367 = vpop.permute.xlu0 %1366
        %v1369 = vsel %vm1128, %v1365, 0
        %v1372 = vsel %vm1128, %v1367, 0
        %1374 = vmatpush.bf16.xpose.msra.mxu0 0
        %1375 = vmatpush.bf16.xpose.msra.mxu0 0
        %1376 = vmatpush.bf16.xpose.msra.mxu0 0
        %1377 = vmatpush.bf16.xpose.msra.mxu0 0
        %1378 = vmatpush.bf16.xpose.msra.mxu0 0
        %1379 = vmatpush.bf16.xpose.msra.mxu0 0
        %1380 = vmatpush.bf16.xpose.msra.mxu0 0
        %1381 = vmatpush.bf16.xpose.msra.mxu0 %v1372
        %1382 = vmatmul.bf16.gmra.mxu0 %v1369
        %v1383 = vpop.f32.mrf.mxu0
        %v1384 = vadd.f32 0.0, %v1383
        %v1385 = vpop.f32.mrf.mxu0
        %1386 = vdwg.mxu0
        %v1387 = vmul.f32 %v1384, 0.35355338
        %v1388 = vsel %vm1149, %v1387, -inf
        %1389 = vmax.xlane.f32.xlu0 %v1388
        %v1390 = vpop.xlane.xlu0 %1389
        %v1391 = vsub.f32 %v1387, %v1390
        %v1392 = vmul.f32 %v1391, 1.442695
        %v1393 = vpow.pop %v1392
        %v1394 = vsel %vm1149, %v1393, 0.0
        %1395 = vadd.xlane.f32.xlu0 %v1394
        %v1396 = vpop.xlane.xlu0 %1395
        %v1397 = vrcp.pop %v1396
        %v1398 = vmul.f32 %v1393, %v1397
        %v1399 = vpack.c.bf16 %v1398, %v1398
        %1400 = vrot.lane.b32.xlu0 %v1124, 40
        %v1401 = vpop.permute.xlu0 %1400
        %v1403 = vsel %vm1164, %v1399, 0
        %v1406 = vand.u32 %v1401, %v1171
        %1408 = vmatpush.bf16.msra.mxu0 0
        %1409 = vmatpush.bf16.msra.mxu0 0
        %1410 = vmatpush.bf16.msra.mxu0 0
        %1411 = vmatpush.bf16.msra.mxu0 0
        %1412 = vmatpush.bf16.msra.mxu0 0
        %1413 = vmatpush.bf16.msra.mxu0 0
        %1414 = vmatpush.bf16.msra.mxu0 0
        %1415 = vmatpush.bf16.msra.mxu0 %v1406
        %1416 = vmatmul.bf16.gmra.mxu0 %v1403
        %v1417 = vpop.f32.mrf.mxu0
        %v1418 = vadd.f32 0.0, %v1417
        %v1419 = vpop.f32.mrf.mxu0
        %1420 = vdwg.mxu0
        %v1421 = vpack.c.bf16 %v1418, %v1418
        %v1423 = vsel %vm1128, %v1421, 0
        %v1426 = vsel %vm1250, %v1123, 0
        %1428 = vmatpush.bf16.msra.mxu0 0
        %1429 = vmatpush.bf16.msra.mxu0 0
        %1430 = vmatpush.bf16.msra.mxu0 0
        %1431 = vmatpush.bf16.msra.mxu0 0
        %1432 = vmatpush.bf16.msra.mxu0 0
        %1433 = vmatpush.bf16.msra.mxu0 0
        %1434 = vmatpush.bf16.msra.mxu0 0
        %1435 = vmatpush.bf16.msra.mxu0 %v1426
        %1436 = vmatmul.bf16.gmra.mxu0 %v1423
        %v1437 = vpop.f32.mrf.mxu0
        %v1438 = vadd.f32 0.0, %v1437
        %v1439 = vpop.f32.mrf.mxu0
        %1440 = vdwg.mxu0
        %v1441 = vadd.f32 %v1363, %v1438
        %v1442 = vadd.f32 %v1041, %v1441
        %v1443 = vld [vmem:[%s815] sm:$0x1]
        %v1445 = vperm.slane %v1443, 0
        %v1447 = vadd.f32 %v1442, %v1445
        %v1448 = vld [vmem:[%s796] sm:$0x1]
        %v1449 = vld [vmem:[%s799] sm:$0x1]
        %v1450 = vsel %vm1044, %v1447, 0.0
        %1451 = vadd.xlane.f32.xlu0 %v1450
        %v1452 = vpop.xlane.xlu0 %1451
        %v1453 = vmul.f32 %v1452, %v1054
        %v1454 = vsub.f32 %v1447, %v1453
        %v1455 = vmul.f32 %v1454, %v1454
        %v1456 = vsel %vm1044, %v1455, 0.0
        %1457 = vadd.xlane.f32.xlu0 %v1456
        %v1458 = vpop.xlane.xlu0 %1457
        %v1459 = vmul.f32 %v1458, %v1054
        %v1460 = vadd.f32 %v1459, 1e-05
        %v1461 = vrsqrt.pop %v1460
        %v1462 = vmul.f32 %v1461, %v1460
        %v1463 = vmul.f32 %v1462, %v1461
        %v1464 = vmul.f32 0.5, %v1463
        %v1465 = vsub.f32 1.5, %v1464
        %v1466 = vmul.f32 %v1461, %v1465
        %vm1467 = vweird.f32 %v1460
        %vm1468 = vweird.f32 %v1461
        %vm1469 = vmor %vm1467, %vm1468
        %v1470 = vsel %vm1469, %v1461, %v1466
        %v1471 = vmul.f32 %v1454, %v1470
        %v1473 = vperm.slane %v1448, 0
        %v1475 = vmul.f32 %v1471, %v1473
        %v1477 = vperm.slane %v1449, 0
        %v1479 = vadd.f32 %v1475, %v1477
        %v1480 = vpack.c.bf16 %v1479, %v1479
        %v1481 = vld [vmem:[%s820] sm:$0xf]
        %v1482 = vld [vmem:[%s820 + $0x4] sm:$0xf]
        %v1483 = vld [vmem:[%s820 + $0x8] sm:$0xf]
        %v1484 = vld [vmem:[%s820 + $0xc] sm:$0xf]
        %v1485 = vld [vmem:[%s823] sm:$0x1]
        %v1487 = vperm.slane %v1485, 0
        %v1493 = vunpack.c.l.b16 %v1481
        %v1494 = vunpack.c.l.b16 %v1482
        %v1495 = vunpack.c.l.b16 %v1483
        %v1496 = vunpack.c.l.b16 %v1484
        %v1497 = vpack.c.b16 %v1494, %v1493
        %v1498 = vpack.c.b16 %v1496, %v1495
        %v1502 = vsel %vm1103, %v1480, 0
        %1504 = vmatpush.bf16.msra.mxu0 0
        %1505 = vmatpush.bf16.msra.mxu0 0
        %1506 = vmatpush.bf16.msra.mxu0 0
        %1507 = vmatpush.bf16.msra.mxu0 0
        %1508 = vmatpush.bf16.msra.mxu0 0
        %1509 = vmatpush.bf16.msra.mxu0 0
        %1510 = vmatpush.bf16.msra.mxu0 %v1498
        %1511 = vmatpush.bf16.msra.mxu0 %v1497
        %1512 = vmatmul.bf16.gmra.mxu0 %v1502
        %v1513 = vpop.f32.mrf.mxu0
        %v1514 = vadd.f32 %v1487, %v1513
        %v1515 = vpop.f32.mrf.mxu0
        %1516 = vdwg.mxu0
        %v1517 = vmul.f32 %v1514, 1.702
        %v1518 = vxor.u32 %v1517, 2147483648
        %v1519 = vmul.f32 %v1518, 1.442695
        %v1520 = vpow.pop %v1519
        %v1521 = vadd.f32 %v1520, 1.0
        %v1522 = vrcp.pop %v1521
        %v1523 = vmul.f32 %v1521, %v1522
        %v1524 = vsub.f32 1.0, %v1523
        %v1525 = vmul.f32 %v1522, %v1524
        %v1526 = vadd.f32 %v1522, %v1525
        %vm1527 = vweird.f32 %v1521
        %vm1528 = vweird.f32 %v1522
        %vm1529 = vmor %vm1527, %vm1528
        %v1530 = vsel %vm1529, %v1522, %v1526
        %v1531 = vand.u32 2147483647, %v1521
        %vm1532 = vcmp.eq.f32.partialorder %v1531, 8.507059e+37
        %v1533 = vand.u32 %v1521, 2147483648
        %v1534 = vor.u32 1.1754944e-38, %v1533
        %v1535 = vsel %vm1532, %v1534, %v1530
        %v1536 = vmul.f32 1.0, %v1535
        %v1537 = vmul.f32 %v1514, %v1536
        %v1538 = vpack.c.bf16 %v1537, %v1537
        %v1539 = vld [vmem:[%s828] sm:$0xf]
        %v1540 = vld [vmem:[%s828 + $0x4] sm:$0xf]
        %v1541 = vld [vmem:[%s828 + $0x8] sm:$0xf]
        %v1542 = vld [vmem:[%s828 + $0xc] sm:$0xf]
        %v1543 = vld [vmem:[%s828 + $0x10] sm:$0xf]
        %v1544 = vld [vmem:[%s828 + $0x14] sm:$0xf]
        %v1545 = vld [vmem:[%s828 + $0x18] sm:$0xf]
        %v1546 = vld [vmem:[%s828 + $0x1c] sm:$0xf]
        %v1547 = vld [vmem:[%s828 + $0x20] sm:$0xf]
        %v1548 = vld [vmem:[%s828 + $0x24] sm:$0xf]
        %v1549 = vld [vmem:[%s828 + $0x28] sm:$0xf]
        %v1550 = vld [vmem:[%s828 + $0x2c] sm:$0xf]
        %v1551 = vld [vmem:[%s828 + $0x30] sm:$0xf]
        %v1552 = vld [vmem:[%s828 + $0x34] sm:$0xf]
        %v1553 = vld [vmem:[%s828 + $0x38] sm:$0xf]
        %v1554 = vld [vmem:[%s828 + $0x3c] sm:$0xf]
        %v1555 = vld [vmem:[%s831] sm:$0x1]
        %v1557 = vperm.slane %v1555, 0
        %v1575 = vunpack.c.l.b16 %v1539
        %v1576 = vunpack.c.l.b16 %v1540
        %v1577 = vunpack.c.l.b16 %v1541
        %v1578 = vunpack.c.l.b16 %v1542
        %v1579 = vunpack.c.l.b16 %v1543
        %v1580 = vunpack.c.l.b16 %v1544
        %v1581 = vunpack.c.l.b16 %v1545
        %v1582 = vunpack.c.l.b16 %v1546
        %v1583 = vunpack.c.l.b16 %v1547
        %v1584 = vunpack.c.l.b16 %v1548
        %v1585 = vunpack.c.l.b16 %v1549
        %v1586 = vunpack.c.l.b16 %v1550
        %v1587 = vunpack.c.l.b16 %v1551
        %v1588 = vunpack.c.l.b16 %v1552
        %v1589 = vunpack.c.l.b16 %v1553
        %v1590 = vunpack.c.l.b16 %v1554
        %v1591 = vpack.c.b16 %v1576, %v1575
        %v1592 = vpack.c.b16 %v1578, %v1577
        %v1593 = vpack.c.b16 %v1580, %v1579
        %v1594 = vpack.c.b16 %v1582, %v1581
        %v1595 = vpack.c.b16 %v1584, %v1583
        %v1596 = vpack.c.b16 %v1586, %v1585
        %v1597 = vpack.c.b16 %v1588, %v1587
        %v1598 = vpack.c.b16 %v1590, %v1589
        %1607 = vmatpush.bf16.msra.mxu0 %v1598
        %1608 = vmatpush.bf16.msra.mxu0 %v1597
        %1609 = vmatpush.bf16.msra.mxu0 %v1596
        %1610 = vmatpush.bf16.msra.mxu0 %v1595
        %1611 = vmatpush.bf16.msra.mxu0 %v1594
        %1612 = vmatpush.bf16.msra.mxu0 %v1593
        %1613 = vmatpush.bf16.msra.mxu0 %v1592
        %1614 = vmatpush.bf16.msra.mxu0 %v1591
        %1615 = vmatmul.bf16.gmra.mxu0 %v1538
        %v1616 = vpop.f32.mrf.mxu0
        %v1617 = vadd.f32 %v1557, %v1616
        %v1618 = vpop.f32.mrf.mxu0
        %1619 = vdwg.mxu0
        %v1620 = vadd.f32 %v1447, %v1617
        %1621 = vst.msk [vmem:[#allocation2] sm:$0x1f] %vm1044, %v1620
        %p1622 = scmp.eq.s32.totalorder %s39, 1
        // Predicated region
        $region105: #{image_encoder_forward.1} parent=99 // pred_check
          %p1623 = pneg %p1622
        $region106: #{image_encoder_forward.1} parent=99 // pred_check_branch
          %1625 = sbr.rel (%p1623) target = $region108
        $region107: #{image_encoder_forward.1} parent=99 // pred_region
          %v1626 = vld [vmem:[%s6] sm:$0x1]
          %v1627 = vld [vmem:[%s7] sm:$0x1]
          %vm1628 = vcmask 258049
          %v1629 = vsel %vm1628, %v1620, 0.0
          %1630 = vadd.xlane.f32.xlu0 %v1629
          %v1631 = vpop.xlane.xlu0 %1630
          %v1632 = vmul.f32 %v1631, %v1054
          %v1633 = vsub.f32 %v1620, %v1632
          %v1634 = vmul.f32 %v1633, %v1633
          %v1635 = vsel %vm1628, %v1634, 0.0
          %1636 = vadd.xlane.f32.xlu0 %v1635
          %v1637 = vpop.xlane.xlu0 %1636
          %v1638 = vmul.f32 %v1637, %v1054
          %v1639 = vadd.f32 %v1638, 1e-05
          %v1640 = vrsqrt.pop %v1639
          %v1641 = vmul.f32 %v1640, %v1639
          %v1642 = vmul.f32 %v1641, %v1640
          %v1643 = vmul.f32 0.5, %v1642
          %v1644 = vsub.f32 1.5, %v1643
          %v1645 = vmul.f32 %v1640, %v1644
          %vm1646 = vweird.f32 %v1639
          %vm1647 = vweird.f32 %v1640
          %vm1648 = vmor %vm1646, %vm1647
          %v1649 = vsel %vm1648, %v1640, %v1645
          %v1650 = vmul.f32 %v1633, %v1649
          %v1652 = vperm.slane %v1626, 0
          %v1654 = vmul.f32 %v1650, %v1652
          %v1656 = vperm.slane %v1627, 0
          %v1658 = vadd.f32 %v1654, %v1656
          %1659 = vst.msk [vmem:[%s782 - $0x1] sm:$0x1e] %vm1628, %v1658
        $region108: #{image_encoder_forward.1} parent=99 // pred_fallthru
          _
        %s1660 = sand.u32 %s539, 1
        %s1661 = scalar_lea.sflag [#allocation4], %s1660
        %s1662 = sand.u32 %s539, 1
        %s1663 = smul.addr %s1662, 4
        %s1664 = scalar_lea.vmem [#allocation3], %s1663
        // Predicated region
        $region109: #{image_encoder_forward.1} parent=99 // pred_check
          %p1665 = pneg %p549
        $region110: #{image_encoder_forward.1} parent=99 // pred_check_branch
          %1667 = sbr.rel (%p1665) target = $region112
        $region111: #{image_encoder_forward.1} parent=99 // pred_region
          %1669 = vsyncadd %s1661, 0
          %s1670 = smul.addr %s38, 4
          %s1671 = scalar_lea.hbm %s20, %s1670
          %s1673 = sshll.u32 %s1664, 4
          %s1674 = int_to_ptr.vmem [resolvable:$true] %s1673
          %s1675 = sshll.u32 %s1671, 4
          %s1676 = int_to_ptr.hbm [resolvable:$true] %s1675
          %1678 = dma.vmem_to_hbm [thread:$0]  %s1674, 64, %s1676, %s1661
        $region112: #{image_encoder_forward.1} parent=99 // pred_fallthru
          _
      $region100: #{image_encoder_forward.1} parent=5 // pred_fallthru
        _
      %p1679 = scmp.le.s32.totalorder 2, %s29
      // Predicated region
      $region113: #{image_encoder_forward.1} parent=5 // pred_check
        %p1680 = pneg %p1679
      $region114: #{image_encoder_forward.1} parent=5 // pred_check_branch
        %1682 = sbr.rel (%p1680) target = $region116
      $region115: #{image_encoder_forward.1} parent=5 // pred_region
        %s1683 = ssub.s32 %s29, 2
        // Predicated region
        $region117: #{image_encoder_forward.1} parent=115 // pred_check
          %p1684 = pneg %p555
        $region118: #{image_encoder_forward.1} parent=115 // pred_check_branch
          %1686 = sbr.rel (%p1684) target = $region120
        $region119: #{image_encoder_forward.1} parent=115 // pred_region
          %s1687 = sand.u32 %s540, 1
          %s1688 = scalar_lea.sflag [#allocation4], %s1687
          %s1689 = sand.u32 %s540, 1
          %s1690 = smul.addr %s1689, 4
          %s1691 = scalar_lea.vmem [#allocation3], %s1690
          %1693 = dma.done %s1688, 64
        $region120: #{image_encoder_forward.1} parent=115 // pred_fallthru
          _
      $region116: #{image_encoder_forward.1} parent=5 // pred_fallthru
        _
    $region6: #{image_encoder_forward.1} parent=1 // loop_footer
      %s33 = sadd.s32 1, %s29
    $region7: #{image_encoder_forward.1} parent=1 // loop_footer_branch
      %28 = sbr.rel target = $region3
    $region8: #{image_encoder_forward.1} parent=1 // loop_exit
      _
    %1694 = vsyncpa [#allocation4], 1
    %s1695 = scalar_lea.sflag [#allocation4], 1
    %1696 = vsyncpa %s1695, 1

</llo_original>
